<compile_context>
chip_gen: v5e
topology: v5e:2x2
jax: 0.10.0
libtpu: 0.0.40
codegen_flags: <defaults>
</compile_context>

<pallas_src>
import functools

import jax
import jax.numpy as jnp
import numpy as np
from jax.experimental import pallas as pl
from jax.experimental.pallas import tpu as pltpu

_LANE = 128


def _round_up(x, m):
    return (x + m - 1) // m * m


def patches_sampling(image, patch_size, stride):
    """image: [1, C, H, W] -> [N, C, P, P], same ordering as the PyTorch loop."""
    _, _, h, w = image.shape
    patches = []
    for i in range(0, h - patch_size + 1, stride):
        for j in range(0, w - patch_size + 1, stride):
            patches.append(image[:, :, i:i + patch_size, j:j + patch_size])
    return jnp.concatenate(patches, axis=0)


def _style_loss_kernel(synth_ref, style_ref, inv_norm_ref, norm_ref,
                       loss_ref, fid_ref, m_sc, nb_sc, *, ns, tn, d_real):
    """Grid = (synth tiles [parallel], style tiles [arbitrary, reduction])."""
    j = pl.program_id(1)

    @pl.when(j == 0)
    def _init():
        m_sc[...] = jnp.full(m_sc.shape, -jnp.inf, jnp.float32)   # best dot/||w||
        nb_sc[...] = jnp.zeros(nb_sc.shape, jnp.float32)          # ||w|| of best

    s = synth_ref[...]                       # [TM, Dp]  synthesis patches (flat)
    w = style_ref[...]                       # [TN, Dp]  style-patch tile (flat)
    inv_norm = inv_norm_ref[...]             # [1, TN]   1 / ||style patch||
    norm = norm_ref[...]                     # [1, TN]   ||style patch||

    # cross-correlation of every synthesis patch with this style tile (MXU)
    dot = jax.lax.dot_general(s, w, (((1,), (1,)), ((), ())),
                              preferred_element_type=jnp.float32)   # [TM, TN]

    col = jax.lax.broadcasted_iota(jnp.int32, dot.shape, 1)
    valid = (col + j * tn) < ns
    normalized = jnp.where(valid, dot * inv_norm, -jnp.inf)

    # per-tile argmax, first index on ties
    m_tile = jnp.max(normalized, axis=1, keepdims=True)             # [TM, 1]
    idx_tile = jnp.min(jnp.where(normalized == m_tile, col, tn),
                       axis=1, keepdims=True)
    onehot = (col == idx_tile).astype(jnp.float32)                  # [TM, TN]
    nb_tile = jnp.sum(norm * onehot, axis=1, keepdims=True)         # [TM, 1]

    # online update of the running best (strict > keeps earlier tile on ties)
    better = m_tile > m_sc[...]
    m_sc[...] = jnp.where(better, m_tile, m_sc[...])
    nb_sc[...] = jnp.where(better, nb_tile, nb_sc[...])

    @pl.when(j == pl.num_programs(1) - 1)
    def _finalize():
        s_sq = jnp.sum(s * s, axis=1, keepdims=True)                # ||s||^2
        best = m_sc[...]                                            # dot*/||w*||
        nb = nb_sc[...]                                             # ||w*||
        dot_best = best * nb                                        # <s, w*>
        # mean over C*P*P of (s - w*)^2, via algebraic expansion
        loss_per = (s_sq - 2.0 * dot_best + nb * nb) / d_real
        # cosine fidelity: <s,w*>/(||s||*||w*||) == best / ||s||
        fid_per = best / jnp.sqrt(s_sq)
        # lane-dense (unmasked) stores: broadcast the per-row scalar across lanes
        loss_ref[...] = jnp.broadcast_to(loss_per, loss_ref.shape)
        fid_ref[...] = jnp.broadcast_to(fid_per, fid_ref.shape)


def prepare_style(style_flat, *, tn=512):
    """Pad the style matrix and precompute norms / reciprocals (once per target)."""
    ns, d = style_flat.shape
    dp = _round_up(d, _LANE)
    nsp = _round_up(ns, tn)
    style_flat = style_flat.astype(jnp.float32)
    style_p = jnp.zeros((nsp, dp), jnp.float32).at[:ns, :d].set(style_flat)
    norm = jnp.sqrt(jnp.sum(style_flat * style_flat, axis=1))       # [Ns]
    norm_p = jnp.zeros((1, nsp), jnp.float32).at[0, :ns].set(norm)
    inv_norm_p = jnp.zeros((1, nsp), jnp.float32).at[0, :ns].set(1.0 / norm)
    return dict(style_p=style_p, norm_p=norm_p, inv_norm_p=inv_norm_p,
                ns=ns, d=d, nsp=nsp, tn=tn)


def style_loss_per_patch(synth_flat, prepared, *, tm=128):
    """Per-synthesis-patch MRF loss & cosine fidelity via the Pallas kernel."""
    nt, d = synth_flat.shape
    assert d == prepared["d"], "synthesis/style patch dims must match"
    tn = prepared["tn"]
    ns, nsp = prepared["ns"], prepared["nsp"]
    dp = prepared["style_p"].shape[1]
    ntp = _round_up(nt, tm)

    synth_p = jnp.zeros((ntp, dp), jnp.float32).at[:nt, :d].set(
        synth_flat.astype(jnp.float32))

    kernel = functools.partial(_style_loss_kernel, ns=ns, tn=tn, d_real=float(d))
    # NOTE: bf16 matmul inputs (with f32 accumulate) are a further v6e/v7x win;
    # kept f32 here so the argmax / loss match the f32 reference bit-for-bit
    # within tight tolerances.
    loss_out, fid_out = pl.pallas_call(
        kernel,
        out_shape=(jax.ShapeDtypeStruct((ntp, _LANE), jnp.float32),
                   jax.ShapeDtypeStruct((ntp, _LANE), jnp.float32)),
        grid_spec=pltpu.PrefetchScalarGridSpec(
            num_scalar_prefetch=0,
            grid=(ntp // tm, nsp // tn),
            in_specs=[
                pl.BlockSpec((tm, dp), lambda i, j: (i, 0)),   # synth tile
                pl.BlockSpec((tn, dp), lambda i, j: (j, 0)),   # streamed style tile
                pl.BlockSpec((1, tn), lambda i, j: (0, j)),    # 1/||w|| tile
                pl.BlockSpec((1, tn), lambda i, j: (0, j)),    # ||w|| tile
            ],
            out_specs=(pl.BlockSpec((tm, _LANE), lambda i, j: (i, 0)),
                       pl.BlockSpec((tm, _LANE), lambda i, j: (i, 0))),
            scratch_shapes=[pltpu.VMEM((tm, 1), jnp.float32),   # running max
                            pltpu.VMEM((tm, 1), jnp.float32)],  # ||w|| of best
        ),
        compiler_params=pltpu.CompilerParams(
            dimension_semantics=("parallel", "arbitrary"),
            vmem_limit_bytes=48 * 1024 * 1024),
    )(synth_p, prepared["style_p"], prepared["inv_norm_p"], prepared["norm_p"])
    return loss_out[:nt, 0], fid_out[:nt, 0]


class StyleLoss:
    """JAX/Pallas port of the PyTorch StyleLoss module (forward semantics)."""

    def __init__(self, target, patch_size, mrf_style_stride,
                 mrf_synthesis_stride, gpu_chunck_size, style_tile=512):
        self.patch_size = patch_size
        self.mrf_style_stride = mrf_style_stride
        self.mrf_synthesis_stride = mrf_synthesis_stride
        self.gpu_chunck_size = gpu_chunck_size
        self.style_tile = style_tile
        self.loss = None
        self.fidelity = None
        self.update(target)

    def update(self, target):
        self.style_patches = patches_sampling(
            target, self.patch_size, self.mrf_style_stride)     # [Ns, C, P, P]
        ns = self.style_patches.shape[0]
        self.style_patches_flat = self.style_patches.reshape(ns, -1)
        self.style_patches_norm = jnp.sqrt(
            jnp.sum(self.style_patches_flat ** 2, axis=1))      # [Ns]
        # padding, norms, reciprocals hoisted here: computed once per target
        self._prepared = prepare_style(self.style_patches_flat,
                                       tn=self.style_tile)

    def forward(self, x):
        synth = patches_sampling(x, self.patch_size, self.mrf_synthesis_stride)
        nt = synth.shape[0]
        synth_flat = synth.reshape(nt, -1)

        loss_per, fid_per = style_loss_per_patch(synth_flat, self._prepared)

        chunk = self.gpu_chunck_size
        # loss: sum of per-patch means, accumulated in chunks, then / Nt
        loss = jnp.float32(0.0)
        for i in range(0, nt, chunk):
            loss = loss + jnp.sum(loss_per[i:min(i + chunk, nt)])
        self.loss = loss / nt

        # fidelity: reproduces the original chunked accumulation exactly
        # (fidelity_patches list persists across chunks, as in the PyTorch code)
        fidelity = jnp.float32(0.0)
        fid_acc = []
        for i in range(0, nt, chunk):
            i_end = min(i + chunk, nt)
            fid_acc.append(fid_per[i:i_end])
            fidelity = fidelity + jnp.sum(jnp.concatenate(fid_acc)) / (i_end - i)
        self.fidelity = fidelity / nt
        return x


def _reference_per_patch(synth_flat, style_flat, style_norm):
    """Pure-JAX reference of the per-patch hot path for validation."""
    dot = synth_flat @ style_flat.T
    idx = jnp.argmax(dot / style_norm[None, :], axis=1)
    best = style_flat[idx]
    loss_per = jnp.mean((synth_flat - best) ** 2, axis=1)
    fid_per = jnp.sum(synth_flat * best, axis=1) / (
        jnp.linalg.norm(synth_flat, axis=1) * style_norm[idx])
    return loss_per, fid_per


if __name__ == "__main__":
    key = jax.random.PRNGKey(0)
    k1, k2, k3, k4 = jax.random.split(key, 4)

    # --- main module run: NCHW, batch=1, C=4, 16x16 ---------------------------
    target = jax.random.normal(k1, (1, 4, 16, 16), jnp.float32)
    x = jax.random.normal(k2, (1, 4, 16, 16), jnp.float32)

    sl = StyleLoss(target, patch_size=3, mrf_style_stride=2,
                   mrf_synthesis_stride=2, gpu_chunck_size=16)
    out = sl.forward(x)
    jax.block_until_ready((out, sl.loss, sl.fidelity))

    # --- sanity check of the kernel hot path vs a pure-JAX reference ----------
    synth = patches_sampling(x, 3, 2)
    sf = synth.reshape(synth.shape[0], -1)
    k_loss, k_fid = style_loss_per_patch(sf, sl._prepared)
    r_loss, r_fid = _reference_per_patch(sf, sl.style_patches_flat,
                                         sl.style_patches_norm)
    np.testing.assert_allclose(np.asarray(k_loss), np.asarray(r_loss),
                               rtol=1e-4, atol=1e-5)
    np.testing.assert_allclose(np.asarray(k_fid), np.asarray(r_fid),
                               rtol=1e-4, atol=1e-5)

    # --- second check exercising multiple style tiles (online argmax) and
    #     multiple synthesis tiles: 40x40 -> 361 patches, tn=128 -> 3 style tiles
    target2 = jax.random.normal(k3, (1, 4, 40, 40), jnp.float32)
    x2 = jax.random.normal(k4, (1, 4, 40, 40), jnp.float32)
    st2 = patches_sampling(target2, 3, 2)
    sy2 = patches_sampling(x2, 3, 2)
    st2_flat = st2.reshape(st2.shape[0], -1)
    sy2_flat = sy2.reshape(sy2.shape[0], -1)
    prepared2 = prepare_style(st2_flat, tn=128)
    k2_loss, k2_fid = style_loss_per_patch(sy2_flat, prepared2, tm=128)
    st2_norm = jnp.sqrt(jnp.sum(st2_flat ** 2, axis=1))
    r2_loss, r2_fid = _reference_per_patch(sy2_flat, st2_flat, st2_norm)
    np.testing.assert_allclose(np.asarray(k2_loss), np.asarray(r2_loss),
                               rtol=1e-4, atol=1e-5)
    np.testing.assert_allclose(np.asarray(k2_fid), np.asarray(r2_fid),
                               rtol=1e-4, atol=1e-5)

    print("KERNEL_OK")
</pallas_src>

<mosaic_0001>
module attributes {stable_mosaic.version = 11 : i64} {
  func.func @_style_loss_kernel(%arg0: i32, %arg1: i32, %arg2: memref<128x128xf32, #tpu.memory_space<vmem>>, %arg3: memref<512x128xf32, #tpu.memory_space<vmem>>, %arg4: memref<1x512xf32, #tpu.memory_space<vmem>>, %arg5: memref<1x512xf32, #tpu.memory_space<vmem>>, %arg6: memref<128x128xf32, #tpu.memory_space<vmem>>, %arg7: memref<128x128xf32, #tpu.memory_space<vmem>>, %arg8: memref<128x1xf32, #tpu.memory_space<vmem>>, %arg9: memref<128x1xf32, #tpu.memory_space<vmem>>) attributes {dimension_semantics = [#tpu.dimension_semantics<parallel>, #tpu.dimension_semantics<arbitrary>], iteration_bounds = array<i64: 1, 1>, scalar_prefetch = 0 : i64, scratch_operands = 2 : i64, tpu.core_type = #tpu.core_type<tc>, window_params = [{transform_indices = @transform_0, window_bounds = array<i64: 128, 128>}, {transform_indices = @transform_1, window_bounds = array<i64: 512, 128>}, {transform_indices = @transform_2, window_bounds = array<i64: 1, 512>}, {transform_indices = @transform_3, window_bounds = array<i64: 1, 512>}, {transform_indices = @transform_4, window_bounds = array<i64: 128, 128>}, {transform_indices = @transform_5, window_bounds = array<i64: 128, 128>}]} {
    %c0_i32 = arith.constant 0 : i32
    %0 = arith.cmpi eq, %arg1, %c0_i32 : i32
    %1 = arith.extui %0 : i1 to i32
    %c0_i32_0 = arith.constant 0 : i32
    %2 = arith.cmpi ne, %1, %c0_i32_0 : i32
    scf.if %2 {
      %cst_25 = arith.constant 0xFF800000 : f32
      %45 = vector.broadcast %cst_25 : f32 to vector<128x1xf32>
      %c0_26 = arith.constant 0 : index
      %c0_27 = arith.constant 0 : index
      %46 = vector.load %arg8[%c0_26, %c0_27] : memref<128x1xf32, #tpu.memory_space<vmem>>, vector<128x1xf32>
      tpu.vector_store %arg8[%c0_26, %c0_27], %45 {strides = array<i32>} : memref<128x1xf32, #tpu.memory_space<vmem>>, vector<128x1xf32>,
      %cst_28 = arith.constant 0.000000e+00 : f32
      %47 = vector.broadcast %cst_28 : f32 to vector<128x1xf32>
      %c0_29 = arith.constant 0 : index
      %c0_30 = arith.constant 0 : index
      %48 = vector.load %arg9[%c0_29, %c0_30] : memref<128x1xf32, #tpu.memory_space<vmem>>, vector<128x1xf32>
      tpu.vector_store %arg9[%c0_29, %c0_30], %47 {strides = array<i32>} : memref<128x1xf32, #tpu.memory_space<vmem>>, vector<128x1xf32>,
    } else {
    }
    %c0 = arith.constant 0 : index
    %c0_1 = arith.constant 0 : index
    %3 = vector.load %arg2[%c0, %c0_1] : memref<128x128xf32, #tpu.memory_space<vmem>>, vector<128x128xf32>
    %c0_2 = arith.constant 0 : index
    %c0_3 = arith.constant 0 : index
    %4 = vector.load %arg3[%c0_2, %c0_3] : memref<512x128xf32, #tpu.memory_space<vmem>>, vector<512x128xf32>
    %c0_4 = arith.constant 0 : index
    %c0_5 = arith.constant 0 : index
    %5 = vector.load %arg4[%c0_4, %c0_5] : memref<1x512xf32, #tpu.memory_space<vmem>>, vector<1x512xf32>
    %c0_6 = arith.constant 0 : index
    %c0_7 = arith.constant 0 : index
    %6 = vector.load %arg5[%c0_6, %c0_7] : memref<1x512xf32, #tpu.memory_space<vmem>>, vector<1x512xf32>
    %cst = arith.constant dense<0.000000e+00> : vector<128x512xf32>
    %7 = tpu.matmul %3, %4, %cst {dimension_numbers = #tpu.dot_dimension_numbers<[1], [1], [0], [0], [0, 0, 1, 0], [], []>} : vector<128x128xf32>, vector<512x128xf32>, vector<128x512xf32> -> vector<128x512xf32>
    %8 = tpu.iota {dimensions = array<i32: 1>} : vector<128x512xi32>
    %c512_i32 = arith.constant 512 : i32
    %9 = arith.muli %arg1, %c512_i32 : i32
    %10 = vector.broadcast %9 : i32 to vector<128x512xi32>
    %11 = arith.addi %8, %10 : vector<128x512xi32>
    %c49_i32 = arith.constant 49 : i32
    %12 = vector.broadcast %c49_i32 : i32 to vector<128x512xi32>
    %13 = arith.cmpi slt, %11, %12 : vector<128x512xi32>
    %14 = vector.broadcast %5 : vector<1x512xf32> to vector<128x512xf32>
    %15 = arith.mulf %7, %14 : vector<128x512xf32>
    %cst_8 = arith.constant 0xFF800000 : f32
    %16 = vector.broadcast %cst_8 : f32 to vector<128x512xf32>
    %17 = arith.select %13, %15, %16 : vector<128x512xi1>, vector<128x512xf32>
    %cst_9 = arith.constant dense<0xFF800000> : vector<128xf32>
    %18 = vector.multi_reduction <maximumf>, %17, %cst_9 [1] : vector<128x512xf32> to vector<128xf32>
    %19 = vector.shape_cast %18 : vector<128xf32> to vector<128x1xf32>
    %20 = vector.broadcast %19 : vector<128x1xf32> to vector<128x512xf32>
    %21 = arith.cmpf oeq, %17, %20 : vector<128x512xf32>
    %c512_i32_10 = arith.constant 512 : i32
    %22 = vector.broadcast %c512_i32_10 : i32 to vector<128x512xi32>
    %23 = arith.select %21, %8, %22 : vector<128x512xi1>, vector<128x512xi32>
    %cst_11 = arith.constant dense<2147483647> : vector<128xi32>
    %24 = vector.multi_reduction <minsi>, %23, %cst_11 [1] : vector<128x512xi32> to vector<128xi32>
    %25 = vector.shape_cast %24 : vector<128xi32> to vector<128x1xi32>
    %26 = vector.broadcast %25 : vector<128x1xi32> to vector<128x512xi32>
    %27 = arith.cmpi eq, %8, %26 : vector<128x512xi32>
    %28 = arith.extui %27 : vector<128x512xi1> to vector<128x512xi32>
    %29 = arith.sitofp %28 : vector<128x512xi32> to vector<128x512xf32>
    %30 = vector.broadcast %6 : vector<1x512xf32> to vector<128x512xf32>
    %31 = arith.mulf %30, %29 : vector<128x512xf32>
    %cst_12 = arith.constant dense<0.000000e+00> : vector<128xf32>
    %32 = vector.multi_reduction <add>, %31, %cst_12 [1] : vector<128x512xf32> to vector<128xf32>
    %33 = vector.shape_cast %32 : vector<128xf32> to vector<128x1xf32>
    %c0_13 = arith.constant 0 : index
    %c0_14 = arith.constant 0 : index
    %34 = vector.load %arg8[%c0_13, %c0_14] : memref<128x1xf32, #tpu.memory_space<vmem>>, vector<128x1xf32>
    %35 = arith.cmpf ogt, %19, %34 : vector<128x1xf32>
    %c0_15 = arith.constant 0 : index
    %c0_16 = arith.constant 0 : index
    %36 = vector.load %arg8[%c0_15, %c0_16] : memref<128x1xf32, #tpu.memory_space<vmem>>, vector<128x1xf32>
    %37 = arith.select %35, %19, %36 : vector<128x1xi1>, vector<128x1xf32>
    %c0_17 = arith.constant 0 : index
    %c0_18 = arith.constant 0 : index
    %38 = vector.load %arg8[%c0_17, %c0_18] : memref<128x1xf32, #tpu.memory_space<vmem>>, vector<128x1xf32>
    tpu.vector_store %arg8[%c0_17, %c0_18], %37 {strides = array<i32>} : memref<128x1xf32, #tpu.memory_space<vmem>>, vector<128x1xf32>,
    %c0_19 = arith.constant 0 : index
    %c0_20 = arith.constant 0 : index
    %39 = vector.load %arg9[%c0_19, %c0_20] : memref<128x1xf32, #tpu.memory_space<vmem>>, vector<128x1xf32>
    %40 = arith.select %35, %33, %39 : vector<128x1xi1>, vector<128x1xf32>
    %c0_21 = arith.constant 0 : index
    %c0_22 = arith.constant 0 : index
    %41 = vector.load %arg9[%c0_21, %c0_22] : memref<128x1xf32, #tpu.memory_space<vmem>>, vector<128x1xf32>
    tpu.vector_store %arg9[%c0_21, %c0_22], %40 {strides = array<i32>} : memref<128x1xf32, #tpu.memory_space<vmem>>, vector<128x1xf32>,
    %c0_i32_23 = arith.constant 0 : i32
    %42 = arith.cmpi eq, %arg1, %c0_i32_23 : i32
    %43 = arith.extui %42 : i1 to i32
    %c0_i32_24 = arith.constant 0 : i32
    %44 = arith.cmpi ne, %43, %c0_i32_24 : i32
    scf.if %44 {
      %45 = arith.mulf %3, %3 : vector<128x128xf32>
      %cst_25 = arith.constant dense<0.000000e+00> : vector<128xf32>
      %46 = vector.multi_reduction <add>, %45, %cst_25 [1] : vector<128x128xf32> to vector<128xf32>
      %47 = vector.shape_cast %46 : vector<128xf32> to vector<128x1xf32>
      %c0_26 = arith.constant 0 : index
      %c0_27 = arith.constant 0 : index
      %48 = vector.load %arg8[%c0_26, %c0_27] : memref<128x1xf32, #tpu.memory_space<vmem>>, vector<128x1xf32>
      %c0_28 = arith.constant 0 : index
      %c0_29 = arith.constant 0 : index
      %49 = vector.load %arg9[%c0_28, %c0_29] : memref<128x1xf32, #tpu.memory_space<vmem>>, vector<128x1xf32>
      %50 = arith.mulf %48, %49 : vector<128x1xf32>
      %cst_30 = arith.constant 2.000000e+00 : f32
      %51 = vector.broadcast %cst_30 : f32 to vector<128x1xf32>
      %52 = arith.mulf %51, %50 : vector<128x1xf32>
      %53 = arith.subf %47, %52 : vector<128x1xf32>
      %54 = arith.mulf %49, %49 : vector<128x1xf32>
      %55 = arith.addf %53, %54 : vector<128x1xf32>
      %cst_31 = arith.constant 3.600000e+01 : f32
      %56 = vector.broadcast %cst_31 : f32 to vector<128x1xf32>
      %57 = arith.divf %55, %56 : vector<128x1xf32>
      %58 = math.sqrt %47 : vector<128x1xf32>
      %59 = arith.divf %48, %58 : vector<128x1xf32>
      %60 = vector.shape_cast %57 : vector<128x1xf32> to vector<128x1xf32>
      %61 = vector.broadcast %60 : vector<128x1xf32> to vector<128x128xf32>
      %c0_32 = arith.constant 0 : index
      %c0_33 = arith.constant 0 : index
      %62 = vector.load %arg6[%c0_32, %c0_33] : memref<128x128xf32, #tpu.memory_space<vmem>>, vector<128x128xf32>
      tpu.vector_store %arg6[%c0_32, %c0_33], %61 {strides = array<i32>} : memref<128x128xf32, #tpu.memory_space<vmem>>, vector<128x128xf32>,
      %63 = vector.shape_cast %59 : vector<128x1xf32> to vector<128x1xf32>
      %64 = vector.broadcast %63 : vector<128x1xf32> to vector<128x128xf32>
      %c0_34 = arith.constant 0 : index
      %c0_35 = arith.constant 0 : index
      %65 = vector.load %arg7[%c0_34, %c0_35] : memref<128x128xf32, #tpu.memory_space<vmem>>, vector<128x128xf32>
      tpu.vector_store %arg7[%c0_34, %c0_35], %64 {strides = array<i32>} : memref<128x128xf32, #tpu.memory_space<vmem>>, vector<128x128xf32>,
    } else {
    }
    return
  }
  func.func @transform_0(%arg0: i32, %arg1: i32) -> (i32, i32) {
    %c0_i32 = arith.constant 0 : i32
    %c0_i32_0 = arith.constant 0 : i32
    return %arg0, %c0_i32 : i32, i32
  }
  func.func @transform_1(%arg0: i32, %arg1: i32) -> (i32, i32) {
    %c0_i32 = arith.constant 0 : i32
    %c0_i32_0 = arith.constant 0 : i32
    return %arg1, %c0_i32 : i32, i32
  }
  func.func @transform_2(%arg0: i32, %arg1: i32) -> (i32, i32) {
    %c0_i32 = arith.constant 0 : i32
    %c0_i32_0 = arith.constant 0 : i32
    return %c0_i32, %arg1 : i32, i32
  }
  func.func @transform_3(%arg0: i32, %arg1: i32) -> (i32, i32) {
    %c0_i32 = arith.constant 0 : i32
    %c0_i32_0 = arith.constant 0 : i32
    return %c0_i32, %arg1 : i32, i32
  }
  func.func @transform_4(%arg0: i32, %arg1: i32) -> (i32, i32) {
    %c0_i32 = arith.constant 0 : i32
    %c0_i32_0 = arith.constant 0 : i32
    return %arg0, %c0_i32 : i32, i32
  }
  func.func @transform_5(%arg0: i32, %arg1: i32) -> (i32, i32) {
    %c0_i32 = arith.constant 0 : i32
    %c0_i32_0 = arith.constant 0 : i32
    return %arg0, %c0_i32 : i32, i32
  }
}

</mosaic_0001>

<llo_original>
// kernel: tpu_custom_call.1
$region0: #{tpu_custom_call.1}
  #allocation0 [shape = 'u32[]', space=smem, size = 0x4, offset = 0x4, fixed_abs, tag = 'smem constant byte address 0x4 - core index']
  #allocation1 [shape = 'u32[72,128]{1,0:T(1,128)}', space=vmem, size = 0x9000, scoped, tag = 'internal scratch']
  #allocation2 [shape = 'f32[128,1]{1,0:T(8,128)}', space=vmem, size = 0x10000, scoped, tag = 'scratch operand']
  #allocation3 [shape = 'f32[128,1]{1,0:T(8,128)}', space=vmem, size = 0x10000, scoped, tag = 'scratch operand']
  %s0 = inlined_call_operand.hbm [shape: f32[128,128], index: 0, kind: input, shape index: {}]
  %s1 = inlined_call_operand.hbm [shape: f32[512,128], index: 1, kind: input, shape index: {}]
  %s2 = inlined_call_operand.hbm [shape: f32[1,512], index: 2, kind: input, shape index: {}]
  %s3 = inlined_call_operand.hbm [shape: f32[1,512], index: 3, kind: input, shape index: {}]
  %s4 = inlined_call_operand.hbm [shape: f32[128,128], index: 4, kind: output, shape index: {0}]
  %s5 = inlined_call_operand.hbm [shape: f32[128,128], index: 5, kind: output, shape index: {1}]
  %6 = xla_tuple %s4, %s5
  %s7 = sld [smem:[#allocation0]]
  $region58: #{tpu_custom_call.1} parent=0
    _
  %s9 = ssub.s32 1, %s7
  %s10 = scalar_select 0, %s9, %s7
  $region1: #{tpu_custom_call.1} parent=0
    #allocation4 [shape = 'u8[65536]{0}', space=vmem, size = 0x10000, scoped, tag = 'input window, operand 0, single buffered']
    #allocation5 [shape = 's32[1]{0}', space=sflag, size = 0x4, scoped, tag = 'scoped memory for tpu_custom_call.1']
    #allocation6 [shape = 's32[1]{0}', space=sflag, size = 0x4, scoped, tag = 'scoped memory for tpu_custom_call.1']
    #allocation7 [shape = 'u8[262144]{0}', space=vmem, size = 0x40000, scoped, tag = 'input window, operand 1, single buffered']
    #allocation8 [shape = 's32[1]{0}', space=sflag, size = 0x4, scoped, tag = 'scoped memory for tpu_custom_call.1']
    #allocation9 [shape = 'u8[2048]{0}', space=vmem, size = 0x800, scoped, tag = 'input window, operand 2, single buffered']
    #allocation10 [shape = 'u8[2048]{0}', space=vmem, size = 0x800, scoped, tag = 'input window, operand 3, single buffered']
    #allocation11 [shape = 's32[1]{0}', space=sflag, size = 0x4, scoped, tag = 'scoped memory for tpu_custom_call.1']
    #allocation12 [shape = 'u8[65536]{0}', space=vmem, size = 0x10000, scoped, tag = 'output window, operand 0, single buffered']
    #allocation13 [shape = 'u8[65536]{0}', space=vmem, size = 0x10000, scoped, tag = 'output window, operand 1, single buffered']
    #allocation14 [shape = 's32[1]{0}', space=sflag, size = 0x4, scoped, tag = 'scoped memory for tpu_custom_call.1']
    %11 = vsyncpa [#allocation5], 0
    %12 = vsyncpa [#allocation8], 0
    %13 = vsyncpa [#allocation11], 0
    %14 = vsyncpa [#allocation6], 0
    %15 = vsyncpa [#allocation14], 0
    // Predicated region
    $region2: #{tpu_custom_call.1} parent=1 // pred_check
      _
    $region3: #{tpu_custom_call.1} parent=1 // pred_check_branch
      %17 = sbr.rel (0) target = $region5
    $region4: #{tpu_custom_call.1} parent=1 // pred_region
      %19 = vsyncadd [#allocation5], 0
      %s20 = sshll.u32 %s0, 4
      %s21 = int_to_ptr.hbm [resolvable:$true] %s20
      %s22 = sshll.u32 [#allocation4], 4
      %s23 = int_to_ptr.vmem [resolvable:$true] %s22
      %28 = dma.hbm_to_vmem [thread:$0]  %s21, 2048, %s23, [#allocation5], 128, 128, 8
    $region5: #{tpu_custom_call.1} parent=1 // pred_fallthru
      _
    // Predicated region
    $region6: #{tpu_custom_call.1} parent=1 // pred_check
      _
    $region7: #{tpu_custom_call.1} parent=1 // pred_check_branch
      %30 = sbr.rel (0) target = $region9
    $region8: #{tpu_custom_call.1} parent=1 // pred_region
      %32 = vsyncadd [#allocation8], 0
      %s33 = sshll.u32 %s1, 4
      %s34 = int_to_ptr.hbm [resolvable:$true] %s33
      %s35 = sshll.u32 [#allocation7], 4
      %s36 = int_to_ptr.vmem [resolvable:$true] %s35
      %41 = dma.hbm_to_vmem [thread:$0]  %s34, 8192, %s36, [#allocation8], 128, 128, 8
    $region9: #{tpu_custom_call.1} parent=1 // pred_fallthru
      _
    // Predicated region
    $region10: #{tpu_custom_call.1} parent=1 // pred_check
      _
    $region11: #{tpu_custom_call.1} parent=1 // pred_check_branch
      %43 = sbr.rel (0) target = $region13
    $region12: #{tpu_custom_call.1} parent=1 // pred_region
      %45 = vsyncadd [#allocation8], 0
      %s47 = sshll.u32 %s2, 4
      %s48 = int_to_ptr.hbm [resolvable:$true] %s47
      %s49 = sshll.u32 [#allocation9], 4
      %s50 = int_to_ptr.vmem [resolvable:$true] %s49
      %52 = dma.hbm_to_vmem [thread:$0]  %s48, 64, %s50, [#allocation8]
    $region13: #{tpu_custom_call.1} parent=1 // pred_fallthru
      _
    // Predicated region
    $region14: #{tpu_custom_call.1} parent=1 // pred_check
      _
    $region15: #{tpu_custom_call.1} parent=1 // pred_check_branch
      %54 = sbr.rel (0) target = $region17
    $region16: #{tpu_custom_call.1} parent=1 // pred_region
      %56 = vsyncadd [#allocation11], 0
      %s58 = sshll.u32 %s3, 4
      %s59 = int_to_ptr.hbm [resolvable:$true] %s58
      %s60 = sshll.u32 [#allocation10], 4
      %s61 = int_to_ptr.vmem [resolvable:$true] %s60
      %63 = dma.hbm_to_vmem [thread:$0]  %s59, 64, %s61, [#allocation11]
    $region17: #{tpu_custom_call.1} parent=1 // pred_fallthru
      _
    // Predicated region
    $region18: #{tpu_custom_call.1} parent=1 // pred_check
      _
    $region19: #{tpu_custom_call.1} parent=1 // pred_check_branch
      %65 = sbr.rel (0) target = $region21
    $region20: #{tpu_custom_call.1} parent=1 // pred_region
      %67 = dma.done [#allocation5], 2048
    $region21: #{tpu_custom_call.1} parent=1 // pred_fallthru
      _
    // Predicated region
    $region22: #{tpu_custom_call.1} parent=1 // pred_check
      _
    $region23: #{tpu_custom_call.1} parent=1 // pred_check_branch
      %69 = sbr.rel (0) target = $region25
    $region24: #{tpu_custom_call.1} parent=1 // pred_region
      %71 = dma.done [#allocation8], 8192
    $region25: #{tpu_custom_call.1} parent=1 // pred_fallthru
      _
    // Predicated region
    $region26: #{tpu_custom_call.1} parent=1 // pred_check
      _
    $region27: #{tpu_custom_call.1} parent=1 // pred_check_branch
      %73 = sbr.rel (0) target = $region29
    $region28: #{tpu_custom_call.1} parent=1 // pred_region
      %75 = dma.done [#allocation8], 64
    $region29: #{tpu_custom_call.1} parent=1 // pred_fallthru
      _
    // Predicated region
    $region30: #{tpu_custom_call.1} parent=1 // pred_check
      _
    $region31: #{tpu_custom_call.1} parent=1 // pred_check_branch
      %77 = sbr.rel (0) target = $region33
    $region32: #{tpu_custom_call.1} parent=1 // pred_region
      %79 = dma.done [#allocation11], 64
    $region33: #{tpu_custom_call.1} parent=1 // pred_fallthru
      _
    %p80 = scmp.eq.s32.totalorder 0, 0
    // Predicated region
    $region34: #{tpu_custom_call.1} parent=1 // pred_check
      %p81 = pneg %p80
    $region35: #{tpu_custom_call.1} parent=1 // pred_check_branch
      %83 = sbr.rel (%p81) target = $region37
    $region36: #{tpu_custom_call.1} parent=1 // pred_region
      %vm84 = vcmask 7168
      %85 = vst.msk [vmem:[#allocation2] sm:$0xff] %vm84, -inf
      %86 = vst.msk [vmem:[#allocation2 + $0x8] sm:$0xff] %vm84, -inf
      %87 = vst.msk [vmem:[#allocation2 + $0x10] sm:$0xff] %vm84, -inf
      %88 = vst.msk [vmem:[#allocation2 + $0x18] sm:$0xff] %vm84, -inf
      %89 = vst.msk [vmem:[#allocation2 + $0x20] sm:$0xff] %vm84, -inf
      %90 = vst.msk [vmem:[#allocation2 + $0x28] sm:$0xff] %vm84, -inf
      %91 = vst.msk [vmem:[#allocation2 + $0x30] sm:$0xff] %vm84, -inf
      %92 = vst.msk [vmem:[#allocation2 + $0x38] sm:$0xff] %vm84, -inf
      %93 = vst.msk [vmem:[#allocation2 + $0x40] sm:$0xff] %vm84, -inf
      %94 = vst.msk [vmem:[#allocation2 + $0x48] sm:$0xff] %vm84, -inf
      %95 = vst.msk [vmem:[#allocation2 + $0x50] sm:$0xff] %vm84, -inf
      %96 = vst.msk [vmem:[#allocation2 + $0x58] sm:$0xff] %vm84, -inf
      %97 = vst.msk [vmem:[#allocation2 + $0x60] sm:$0xff] %vm84, -inf
      %98 = vst.msk [vmem:[#allocation2 + $0x68] sm:$0xff] %vm84, -inf
      %99 = vst.msk [vmem:[#allocation2 + $0x70] sm:$0xff] %vm84, -inf
      %100 = vst.msk [vmem:[#allocation2 + $0x78] sm:$0xff] %vm84, -inf
      %101 = vst.msk [vmem:[#allocation3] sm:$0xff] %vm84, 0.0
      %102 = vst.msk [vmem:[#allocation3 + $0x8] sm:$0xff] %vm84, 0.0
      %103 = vst.msk [vmem:[#allocation3 + $0x10] sm:$0xff] %vm84, 0.0
      %104 = vst.msk [vmem:[#allocation3 + $0x18] sm:$0xff] %vm84, 0.0
      %105 = vst.msk [vmem:[#allocation3 + $0x20] sm:$0xff] %vm84, 0.0
      %106 = vst.msk [vmem:[#allocation3 + $0x28] sm:$0xff] %vm84, 0.0
      %107 = vst.msk [vmem:[#allocation3 + $0x30] sm:$0xff] %vm84, 0.0
      %108 = vst.msk [vmem:[#allocation3 + $0x38] sm:$0xff] %vm84, 0.0
      %109 = vst.msk [vmem:[#allocation3 + $0x40] sm:$0xff] %vm84, 0.0
      %110 = vst.msk [vmem:[#allocation3 + $0x48] sm:$0xff] %vm84, 0.0
      %111 = vst.msk [vmem:[#allocation3 + $0x50] sm:$0xff] %vm84, 0.0
      %112 = vst.msk [vmem:[#allocation3 + $0x58] sm:$0xff] %vm84, 0.0
      %113 = vst.msk [vmem:[#allocation3 + $0x60] sm:$0xff] %vm84, 0.0
      %114 = vst.msk [vmem:[#allocation3 + $0x68] sm:$0xff] %vm84, 0.0
      %115 = vst.msk [vmem:[#allocation3 + $0x70] sm:$0xff] %vm84, 0.0
      %116 = vst.msk [vmem:[#allocation3 + $0x78] sm:$0xff] %vm84, 0.0
    $region37: #{tpu_custom_call.1} parent=1 // pred_fallthru
      _
    %v117 = vld [vmem:[#allocation4] sm:$0xff]
    %v118 = vld [vmem:[#allocation4 + $0x8] sm:$0xff]
    %v119 = vld [vmem:[#allocation4 + $0x10] sm:$0xff]
    %v120 = vld [vmem:[#allocation4 + $0x18] sm:$0xff]
    %v121 = vld [vmem:[#allocation4 + $0x20] sm:$0xff]
    %v122 = vld [vmem:[#allocation4 + $0x28] sm:$0xff]
    %v123 = vld [vmem:[#allocation4 + $0x30] sm:$0xff]
    %v124 = vld [vmem:[#allocation4 + $0x38] sm:$0xff]
    %v125 = vld [vmem:[#allocation4 + $0x40] sm:$0xff]
    %v126 = vld [vmem:[#allocation4 + $0x48] sm:$0xff]
    %v127 = vld [vmem:[#allocation4 + $0x50] sm:$0xff]
    %v128 = vld [vmem:[#allocation4 + $0x58] sm:$0xff]
    %v129 = vld [vmem:[#allocation4 + $0x60] sm:$0xff]
    %v130 = vld [vmem:[#allocation4 + $0x68] sm:$0xff]
    %v131 = vld [vmem:[#allocation4 + $0x70] sm:$0xff]
    %v132 = vld [vmem:[#allocation4 + $0x78] sm:$0xff]
    %v133 = vld [vmem:[#allocation7] sm:$0xff]
    %v134 = vld [vmem:[#allocation7 + $0x8] sm:$0xff]
    %v135 = vld [vmem:[#allocation7 + $0x10] sm:$0xff]
    %v136 = vld [vmem:[#allocation7 + $0x18] sm:$0xff]
    %v137 = vld [vmem:[#allocation7 + $0x20] sm:$0xff]
    %v138 = vld [vmem:[#allocation7 + $0x28] sm:$0xff]
    %v139 = vld [vmem:[#allocation7 + $0x30] sm:$0xff]
    %v140 = vld [vmem:[#allocation7 + $0x38] sm:$0xff]
    %v141 = vld [vmem:[#allocation7 + $0x40] sm:$0xff]
    %v142 = vld [vmem:[#allocation7 + $0x48] sm:$0xff]
    %v143 = vld [vmem:[#allocation7 + $0x50] sm:$0xff]
    %v144 = vld [vmem:[#allocation7 + $0x58] sm:$0xff]
    %v145 = vld [vmem:[#allocation7 + $0x60] sm:$0xff]
    %v146 = vld [vmem:[#allocation7 + $0x68] sm:$0xff]
    %v147 = vld [vmem:[#allocation7 + $0x70] sm:$0xff]
    %v148 = vld [vmem:[#allocation7 + $0x78] sm:$0xff]
    %v149 = vld [vmem:[#allocation7 + $0x80] sm:$0xff]
    %v150 = vld [vmem:[#allocation7 + $0x88] sm:$0xff]
    %v151 = vld [vmem:[#allocation7 + $0x90] sm:$0xff]
    %v152 = vld [vmem:[#allocation7 + $0x98] sm:$0xff]
    %v153 = vld [vmem:[#allocation7 + $0xa0] sm:$0xff]
    %v154 = vld [vmem:[#allocation7 + $0xa8] sm:$0xff]
    %v155 = vld [vmem:[#allocation7 + $0xb0] sm:$0xff]
    %v156 = vld [vmem:[#allocation7 + $0xb8] sm:$0xff]
    %v157 = vld [vmem:[#allocation7 + $0xc0] sm:$0xff]
    %v158 = vld [vmem:[#allocation7 + $0xc8] sm:$0xff]
    %v159 = vld [vmem:[#allocation7 + $0xd0] sm:$0xff]
    %v160 = vld [vmem:[#allocation7 + $0xd8] sm:$0xff]
    %v161 = vld [vmem:[#allocation7 + $0xe0] sm:$0xff]
    %v162 = vld [vmem:[#allocation7 + $0xe8] sm:$0xff]
    %v163 = vld [vmem:[#allocation7 + $0xf0] sm:$0xff]
    %v164 = vld [vmem:[#allocation7 + $0xf8] sm:$0xff]
    %v165 = vld [vmem:[#allocation7 + $0x100] sm:$0xff]
    %v166 = vld [vmem:[#allocation7 + $0x108] sm:$0xff]
    %v167 = vld [vmem:[#allocation7 + $0x110] sm:$0xff]
    %v168 = vld [vmem:[#allocation7 + $0x118] sm:$0xff]
    %v169 = vld [vmem:[#allocation7 + $0x120] sm:$0xff]
    %v170 = vld [vmem:[#allocation7 + $0x128] sm:$0xff]
    %v171 = vld [vmem:[#allocation7 + $0x130] sm:$0xff]
    %v172 = vld [vmem:[#allocation7 + $0x138] sm:$0xff]
    %v173 = vld [vmem:[#allocation7 + $0x140] sm:$0xff]
    %v174 = vld [vmem:[#allocation7 + $0x148] sm:$0xff]
    %v175 = vld [vmem:[#allocation7 + $0x150] sm:$0xff]
    %v176 = vld [vmem:[#allocation7 + $0x158] sm:$0xff]
    %v177 = vld [vmem:[#allocation7 + $0x160] sm:$0xff]
    %v178 = vld [vmem:[#allocation7 + $0x168] sm:$0xff]
    %v179 = vld [vmem:[#allocation7 + $0x170] sm:$0xff]
    %v180 = vld [vmem:[#allocation7 + $0x178] sm:$0xff]
    %v181 = vld [vmem:[#allocation7 + $0x180] sm:$0xff]
    %v182 = vld [vmem:[#allocation7 + $0x188] sm:$0xff]
    %v183 = vld [vmem:[#allocation7 + $0x190] sm:$0xff]
    %v184 = vld [vmem:[#allocation7 + $0x198] sm:$0xff]
    %v185 = vld [vmem:[#allocation7 + $0x1a0] sm:$0xff]
    %v186 = vld [vmem:[#allocation7 + $0x1a8] sm:$0xff]
    %v187 = vld [vmem:[#allocation7 + $0x1b0] sm:$0xff]
    %v188 = vld [vmem:[#allocation7 + $0x1b8] sm:$0xff]
    %v189 = vld [vmem:[#allocation7 + $0x1c0] sm:$0xff]
    %v190 = vld [vmem:[#allocation7 + $0x1c8] sm:$0xff]
    %v191 = vld [vmem:[#allocation7 + $0x1d0] sm:$0xff]
    %v192 = vld [vmem:[#allocation7 + $0x1d8] sm:$0xff]
    %v193 = vld [vmem:[#allocation7 + $0x1e0] sm:$0xff]
    %v194 = vld [vmem:[#allocation7 + $0x1e8] sm:$0xff]
    %v195 = vld [vmem:[#allocation7 + $0x1f0] sm:$0xff]
    %v196 = vld [vmem:[#allocation7 + $0x1f8] sm:$0xff]
    %v197 = vld [vmem:[#allocation9] sm:$0xf]
    %v198 = vld [vmem:[#allocation10] sm:$0xf]
    %199 = vmatpush.xpose.msra.mxu0 %v148
    %200 = vmatpush.xpose.msra.mxu0 %v147
    %201 = vmatpush.xpose.msra.mxu0 %v146
    %202 = vmatpush.xpose.msra.mxu0 %v145
    %203 = vmatpush.xpose.msra.mxu0 %v144
    %204 = vmatpush.xpose.msra.mxu0 %v143
    %205 = vmatpush.xpose.msra.mxu0 %v142
    %206 = vmatpush.xpose.msra.mxu0 %v141
    %207 = vmatpush.xpose.msra.mxu0 %v140
    %208 = vmatpush.xpose.msra.mxu0 %v139
    %209 = vmatpush.xpose.msra.mxu0 %v138
    %210 = vmatpush.xpose.msra.mxu0 %v137
    %211 = vmatpush.xpose.msra.mxu0 %v136
    %212 = vmatpush.xpose.msra.mxu0 %v135
    %213 = vmatpush.xpose.msra.mxu0 %v134
    %214 = vmatpush.xpose.msra.mxu0 %v133
    %215 = vmatmul.f32.gmra.mxu0 %v117
    %v216 = vpop.f32.mrf.mxu0
    %v217 = vadd.f32 0.0, %v216
    %218 = vmatmul.f32.gmra.mxu0 %v118
    %v219 = vpop.f32.mrf.mxu0
    %v220 = vadd.f32 0.0, %v219
    %221 = vmatmul.f32.gmra.mxu0 %v119
    %v222 = vpop.f32.mrf.mxu0
    %v223 = vadd.f32 0.0, %v222
    %224 = vmatmul.f32.gmra.mxu0 %v120
    %v225 = vpop.f32.mrf.mxu0
    %v226 = vadd.f32 0.0, %v225
    %227 = vmatmul.f32.gmra.mxu0 %v121
    %v228 = vpop.f32.mrf.mxu0
    %v229 = vadd.f32 0.0, %v228
    %230 = vmatmul.f32.gmra.mxu0 %v122
    %v231 = vpop.f32.mrf.mxu0
    %v232 = vadd.f32 0.0, %v231
    %233 = vmatmul.f32.gmra.mxu0 %v123
    %v234 = vpop.f32.mrf.mxu0
    %v235 = vadd.f32 0.0, %v234
    %236 = vmatmul.f32.gmra.mxu0 %v124
    %v237 = vpop.f32.mrf.mxu0
    %v238 = vadd.f32 0.0, %v237
    %239 = vmatmul.f32.gmra.mxu0 %v125
    %v240 = vpop.f32.mrf.mxu0
    %v241 = vadd.f32 0.0, %v240
    %242 = vmatmul.f32.gmra.mxu0 %v126
    %v243 = vpop.f32.mrf.mxu0
    %v244 = vadd.f32 0.0, %v243
    %245 = vmatmul.f32.gmra.mxu0 %v127
    %v246 = vpop.f32.mrf.mxu0
    %v247 = vadd.f32 0.0, %v246
    %248 = vmatmul.f32.gmra.mxu0 %v128
    %v249 = vpop.f32.mrf.mxu0
    %v250 = vadd.f32 0.0, %v249
    %251 = vmatmul.f32.gmra.mxu0 %v129
    %v252 = vpop.f32.mrf.mxu0
    %v253 = vadd.f32 0.0, %v252
    %254 = vmatmul.f32.gmra.mxu0 %v130
    %v255 = vpop.f32.mrf.mxu0
    %v256 = vadd.f32 0.0, %v255
    %257 = vmatmul.f32.gmra.mxu0 %v131
    %v258 = vpop.f32.mrf.mxu0
    %v259 = vadd.f32 0.0, %v258
    %260 = vmatmul.f32.gmra.mxu0 %v132
    %v261 = vpop.f32.mrf.mxu0
    %v262 = vadd.f32 0.0, %v261
    %263 = vdwg.mxu0
    %264 = vmatpush.xpose.msra.mxu0 %v164
    %265 = vmatpush.xpose.msra.mxu0 %v163
    %266 = vmatpush.xpose.msra.mxu0 %v162
    %267 = vmatpush.xpose.msra.mxu0 %v161
    %268 = vmatpush.xpose.msra.mxu0 %v160
    %269 = vmatpush.xpose.msra.mxu0 %v159
    %270 = vmatpush.xpose.msra.mxu0 %v158
    %271 = vmatpush.xpose.msra.mxu0 %v157
    %272 = vmatpush.xpose.msra.mxu0 %v156
    %273 = vmatpush.xpose.msra.mxu0 %v155
    %274 = vmatpush.xpose.msra.mxu0 %v154
    %275 = vmatpush.xpose.msra.mxu0 %v153
    %276 = vmatpush.xpose.msra.mxu0 %v152
    %277 = vmatpush.xpose.msra.mxu0 %v151
    %278 = vmatpush.xpose.msra.mxu0 %v150
    %279 = vmatpush.xpose.msra.mxu0 %v149
    %280 = vmatmul.f32.gmra.mxu0 %v117
    %v281 = vpop.f32.mrf.mxu0
    %v282 = vadd.f32 0.0, %v281
    %283 = vmatmul.f32.gmra.mxu0 %v118
    %v284 = vpop.f32.mrf.mxu0
    %v285 = vadd.f32 0.0, %v284
    %286 = vmatmul.f32.gmra.mxu0 %v119
    %v287 = vpop.f32.mrf.mxu0
    %v288 = vadd.f32 0.0, %v287
    %289 = vmatmul.f32.gmra.mxu0 %v120
    %v290 = vpop.f32.mrf.mxu0
    %v291 = vadd.f32 0.0, %v290
    %292 = vmatmul.f32.gmra.mxu0 %v121
    %v293 = vpop.f32.mrf.mxu0
    %v294 = vadd.f32 0.0, %v293
    %295 = vmatmul.f32.gmra.mxu0 %v122
    %v296 = vpop.f32.mrf.mxu0
    %v297 = vadd.f32 0.0, %v296
    %298 = vmatmul.f32.gmra.mxu0 %v123
    %v299 = vpop.f32.mrf.mxu0
    %v300 = vadd.f32 0.0, %v299
    %301 = vmatmul.f32.gmra.mxu0 %v124
    %v302 = vpop.f32.mrf.mxu0
    %v303 = vadd.f32 0.0, %v302
    %304 = vmatmul.f32.gmra.mxu0 %v125
    %v305 = vpop.f32.mrf.mxu0
    %v306 = vadd.f32 0.0, %v305
    %307 = vmatmul.f32.gmra.mxu0 %v126
    %v308 = vpop.f32.mrf.mxu0
    %v309 = vadd.f32 0.0, %v308
    %310 = vmatmul.f32.gmra.mxu0 %v127
    %v311 = vpop.f32.mrf.mxu0
    %v312 = vadd.f32 0.0, %v311
    %313 = vmatmul.f32.gmra.mxu0 %v128
    %v314 = vpop.f32.mrf.mxu0
    %v315 = vadd.f32 0.0, %v314
    %316 = vmatmul.f32.gmra.mxu0 %v129
    %v317 = vpop.f32.mrf.mxu0
    %v318 = vadd.f32 0.0, %v317
    %319 = vmatmul.f32.gmra.mxu0 %v130
    %v320 = vpop.f32.mrf.mxu0
    %v321 = vadd.f32 0.0, %v320
    %322 = vmatmul.f32.gmra.mxu0 %v131
    %v323 = vpop.f32.mrf.mxu0
    %v324 = vadd.f32 0.0, %v323
    %325 = vmatmul.f32.gmra.mxu0 %v132
    %v326 = vpop.f32.mrf.mxu0
    %v327 = vadd.f32 0.0, %v326
    %328 = vdwg.mxu0
    %329 = vmatpush.xpose.msra.mxu0 %v180
    %330 = vmatpush.xpose.msra.mxu0 %v179
    %331 = vmatpush.xpose.msra.mxu0 %v178
    %332 = vmatpush.xpose.msra.mxu0 %v177
    %333 = vmatpush.xpose.msra.mxu0 %v176
    %334 = vmatpush.xpose.msra.mxu0 %v175
    %335 = vmatpush.xpose.msra.mxu0 %v174
    %336 = vmatpush.xpose.msra.mxu0 %v173
    %337 = vmatpush.xpose.msra.mxu0 %v172
    %338 = vmatpush.xpose.msra.mxu0 %v171
    %339 = vmatpush.xpose.msra.mxu0 %v170
    %340 = vmatpush.xpose.msra.mxu0 %v169
    %341 = vmatpush.xpose.msra.mxu0 %v168
    %342 = vmatpush.xpose.msra.mxu0 %v167
    %343 = vmatpush.xpose.msra.mxu0 %v166
    %344 = vmatpush.xpose.msra.mxu0 %v165
    %345 = vmatmul.f32.gmra.mxu0 %v117
    %v346 = vpop.f32.mrf.mxu0
    %v347 = vadd.f32 0.0, %v346
    %348 = vmatmul.f32.gmra.mxu0 %v118
    %v349 = vpop.f32.mrf.mxu0
    %v350 = vadd.f32 0.0, %v349
    %351 = vmatmul.f32.gmra.mxu0 %v119
    %v352 = vpop.f32.mrf.mxu0
    %v353 = vadd.f32 0.0, %v352
    %354 = vmatmul.f32.gmra.mxu0 %v120
    %v355 = vpop.f32.mrf.mxu0
    %v356 = vadd.f32 0.0, %v355
    %357 = vmatmul.f32.gmra.mxu0 %v121
    %v358 = vpop.f32.mrf.mxu0
    %v359 = vadd.f32 0.0, %v358
    %360 = vmatmul.f32.gmra.mxu0 %v122
    %v361 = vpop.f32.mrf.mxu0
    %v362 = vadd.f32 0.0, %v361
    %363 = vmatmul.f32.gmra.mxu0 %v123
    %v364 = vpop.f32.mrf.mxu0
    %v365 = vadd.f32 0.0, %v364
    %366 = vmatmul.f32.gmra.mxu0 %v124
    %v367 = vpop.f32.mrf.mxu0
    %v368 = vadd.f32 0.0, %v367
    %369 = vmatmul.f32.gmra.mxu0 %v125
    %v370 = vpop.f32.mrf.mxu0
    %v371 = vadd.f32 0.0, %v370
    %372 = vmatmul.f32.gmra.mxu0 %v126
    %v373 = vpop.f32.mrf.mxu0
    %v374 = vadd.f32 0.0, %v373
    %375 = vmatmul.f32.gmra.mxu0 %v127
    %v376 = vpop.f32.mrf.mxu0
    %v377 = vadd.f32 0.0, %v376
    %378 = vmatmul.f32.gmra.mxu0 %v128
    %v379 = vpop.f32.mrf.mxu0
    %v380 = vadd.f32 0.0, %v379
    %381 = vmatmul.f32.gmra.mxu0 %v129
    %v382 = vpop.f32.mrf.mxu0
    %v383 = vadd.f32 0.0, %v382
    %384 = vmatmul.f32.gmra.mxu0 %v130
    %v385 = vpop.f32.mrf.mxu0
    %v386 = vadd.f32 0.0, %v385
    %387 = vmatmul.f32.gmra.mxu0 %v131
    %v388 = vpop.f32.mrf.mxu0
    %v389 = vadd.f32 0.0, %v388
    %390 = vmatmul.f32.gmra.mxu0 %v132
    %v391 = vpop.f32.mrf.mxu0
    %v392 = vadd.f32 0.0, %v391
    %393 = vdwg.mxu0
    %394 = vmatpush.xpose.msra.mxu0 %v196
    %395 = vmatpush.xpose.msra.mxu0 %v195
    %396 = vmatpush.xpose.msra.mxu0 %v194
    %397 = vmatpush.xpose.msra.mxu0 %v193
    %398 = vmatpush.xpose.msra.mxu0 %v192
    %399 = vmatpush.xpose.msra.mxu0 %v191
    %400 = vmatpush.xpose.msra.mxu0 %v190
    %401 = vmatpush.xpose.msra.mxu0 %v189
    %402 = vmatpush.xpose.msra.mxu0 %v188
    %403 = vmatpush.xpose.msra.mxu0 %v187
    %404 = vmatpush.xpose.msra.mxu0 %v186
    %405 = vmatpush.xpose.msra.mxu0 %v185
    %406 = vmatpush.xpose.msra.mxu0 %v184
    %407 = vmatpush.xpose.msra.mxu0 %v183
    %408 = vmatpush.xpose.msra.mxu0 %v182
    %409 = vmatpush.xpose.msra.mxu0 %v181
    %410 = vmatmul.f32.gmra.mxu0 %v117
    %v411 = vpop.f32.mrf.mxu0
    %v412 = vadd.f32 0.0, %v411
    %413 = vmatmul.f32.gmra.mxu0 %v118
    %v414 = vpop.f32.mrf.mxu0
    %v415 = vadd.f32 0.0, %v414
    %416 = vmatmul.f32.gmra.mxu0 %v119
    %v417 = vpop.f32.mrf.mxu0
    %v418 = vadd.f32 0.0, %v417
    %419 = vmatmul.f32.gmra.mxu0 %v120
    %v420 = vpop.f32.mrf.mxu0
    %v421 = vadd.f32 0.0, %v420
    %422 = vmatmul.f32.gmra.mxu0 %v121
    %v423 = vpop.f32.mrf.mxu0
    %v424 = vadd.f32 0.0, %v423
    %425 = vmatmul.f32.gmra.mxu0 %v122
    %v426 = vpop.f32.mrf.mxu0
    %v427 = vadd.f32 0.0, %v426
    %428 = vmatmul.f32.gmra.mxu0 %v123
    %v429 = vpop.f32.mrf.mxu0
    %v430 = vadd.f32 0.0, %v429
    %431 = vmatmul.f32.gmra.mxu0 %v124
    %v432 = vpop.f32.mrf.mxu0
    %v433 = vadd.f32 0.0, %v432
    %434 = vmatmul.f32.gmra.mxu0 %v125
    %v435 = vpop.f32.mrf.mxu0
    %v436 = vadd.f32 0.0, %v435
    %437 = vmatmul.f32.gmra.mxu0 %v126
    %v438 = vpop.f32.mrf.mxu0
    %v439 = vadd.f32 0.0, %v438
    %440 = vmatmul.f32.gmra.mxu0 %v127
    %v441 = vpop.f32.mrf.mxu0
    %v442 = vadd.f32 0.0, %v441
    %443 = vmatmul.f32.gmra.mxu0 %v128
    %v444 = vpop.f32.mrf.mxu0
    %v445 = vadd.f32 0.0, %v444
    %446 = vmatmul.f32.gmra.mxu0 %v129
    %v447 = vpop.f32.mrf.mxu0
    %v448 = vadd.f32 0.0, %v447
    %449 = vmatmul.f32.gmra.mxu0 %v130
    %v450 = vpop.f32.mrf.mxu0
    %v451 = vadd.f32 0.0, %v450
    %452 = vmatmul.f32.gmra.mxu0 %v131
    %v453 = vpop.f32.mrf.mxu0
    %v454 = vadd.f32 0.0, %v453
    %455 = vmatmul.f32.gmra.mxu0 %v132
    %v456 = vpop.f32.mrf.mxu0
    %v457 = vadd.f32 0.0, %v456
    %458 = vdwg.mxu0
    %v459 = vlaneseq
    %v460 = vand.u32 %v459, 127
    %v461 = vadd.s32 %v460, 128
    %v462 = vadd.s32 %v460, 256
    %v463 = vadd.s32 %v460, 384
    %s464 = smul.u32 0, 512
    %v465 = vstv %s464
    %v466 = vadd.s32 %v460, %v465
    %v467 = vadd.s32 %v461, %v465
    %v468 = vadd.s32 %v462, %v465
    %v469 = vadd.s32 %v463, %v465
    %vm470 = vcmp.lt.s32.totalorder %v466, 49
    %vm471 = vcmp.lt.s32.totalorder %v467, 49
    %vm472 = vcmp.lt.s32.totalorder %v468, 49
    %vm473 = vcmp.lt.s32.totalorder %v469, 49
    %v475 = vperm.slane %v197, 0
    %v476 = vperm.slane %v197, 1
    %v477 = vperm.slane %v197, 2
    %v478 = vperm.slane %v197, 3
    %v483 = vmul.f32 %v217, %v475
    %v484 = vmul.f32 %v282, %v476
    %v485 = vmul.f32 %v347, %v477
    %v486 = vmul.f32 %v412, %v478
    %v487 = vmul.f32 %v220, %v475
    %v488 = vmul.f32 %v285, %v476
    %v489 = vmul.f32 %v350, %v477
    %v490 = vmul.f32 %v415, %v478
    %v491 = vmul.f32 %v223, %v475
    %v492 = vmul.f32 %v288, %v476
    %v493 = vmul.f32 %v353, %v477
    %v494 = vmul.f32 %v418, %v478
    %v495 = vmul.f32 %v226, %v475
    %v496 = vmul.f32 %v291, %v476
    %v497 = vmul.f32 %v356, %v477
    %v498 = vmul.f32 %v421, %v478
    %v499 = vmul.f32 %v229, %v475
    %v500 = vmul.f32 %v294, %v476
    %v501 = vmul.f32 %v359, %v477
    %v502 = vmul.f32 %v424, %v478
    %v503 = vmul.f32 %v232, %v475
    %v504 = vmul.f32 %v297, %v476
    %v505 = vmul.f32 %v362, %v477
    %v506 = vmul.f32 %v427, %v478
    %v507 = vmul.f32 %v235, %v475
    %v508 = vmul.f32 %v300, %v476
    %v509 = vmul.f32 %v365, %v477
    %v510 = vmul.f32 %v430, %v478
    %v511 = vmul.f32 %v238, %v475
    %v512 = vmul.f32 %v303, %v476
    %v513 = vmul.f32 %v368, %v477
    %v514 = vmul.f32 %v433, %v478
    %v515 = vmul.f32 %v241, %v475
    %v516 = vmul.f32 %v306, %v476
    %v517 = vmul.f32 %v371, %v477
    %v518 = vmul.f32 %v436, %v478
    %v519 = vmul.f32 %v244, %v475
    %v520 = vmul.f32 %v309, %v476
    %v521 = vmul.f32 %v374, %v477
    %v522 = vmul.f32 %v439, %v478
    %v523 = vmul.f32 %v247, %v475
    %v524 = vmul.f32 %v312, %v476
    %v525 = vmul.f32 %v377, %v477
    %v526 = vmul.f32 %v442, %v478
    %v527 = vmul.f32 %v250, %v475
    %v528 = vmul.f32 %v315, %v476
    %v529 = vmul.f32 %v380, %v477
    %v530 = vmul.f32 %v445, %v478
    %v531 = vmul.f32 %v253, %v475
    %v532 = vmul.f32 %v318, %v476
    %v533 = vmul.f32 %v383, %v477
    %v534 = vmul.f32 %v448, %v478
    %v535 = vmul.f32 %v256, %v475
    %v536 = vmul.f32 %v321, %v476
    %v537 = vmul.f32 %v386, %v477
    %v538 = vmul.f32 %v451, %v478
    %v539 = vmul.f32 %v259, %v475
    %v540 = vmul.f32 %v324, %v476
    %v541 = vmul.f32 %v389, %v477
    %v542 = vmul.f32 %v454, %v478
    %v543 = vmul.f32 %v262, %v475
    %v544 = vmul.f32 %v327, %v476
    %v545 = vmul.f32 %v392, %v477
    %v546 = vmul.f32 %v457, %v478
    %v547 = vsel %vm470, %v483, -inf
    %v548 = vsel %vm471, %v484, -inf
    %v549 = vsel %vm472, %v485, -inf
    %v550 = vsel %vm473, %v486, -inf
    %v551 = vsel %vm470, %v487, -inf
    %v552 = vsel %vm471, %v488, -inf
    %v553 = vsel %vm472, %v489, -inf
    %v554 = vsel %vm473, %v490, -inf
    %v555 = vsel %vm470, %v491, -inf
    %v556 = vsel %vm471, %v492, -inf
    %v557 = vsel %vm472, %v493, -inf
    %v558 = vsel %vm473, %v494, -inf
    %v559 = vsel %vm470, %v495, -inf
    %v560 = vsel %vm471, %v496, -inf
    %v561 = vsel %vm472, %v497, -inf
    %v562 = vsel %vm473, %v498, -inf
    %v563 = vsel %vm470, %v499, -inf
    %v564 = vsel %vm471, %v500, -inf
    %v565 = vsel %vm472, %v501, -inf
    %v566 = vsel %vm473, %v502, -inf
    %v567 = vsel %vm470, %v503, -inf
    %v568 = vsel %vm471, %v504, -inf
    %v569 = vsel %vm472, %v505, -inf
    %v570 = vsel %vm473, %v506, -inf
    %v571 = vsel %vm470, %v507, -inf
    %v572 = vsel %vm471, %v508, -inf
    %v573 = vsel %vm472, %v509, -inf
    %v574 = vsel %vm473, %v510, -inf
    %v575 = vsel %vm470, %v511, -inf
    %v576 = vsel %vm471, %v512, -inf
    %v577 = vsel %vm472, %v513, -inf
    %v578 = vsel %vm473, %v514, -inf
    %v579 = vsel %vm470, %v515, -inf
    %v580 = vsel %vm471, %v516, -inf
    %v581 = vsel %vm472, %v517, -inf
    %v582 = vsel %vm473, %v518, -inf
    %v583 = vsel %vm470, %v519, -inf
    %v584 = vsel %vm471, %v520, -inf
    %v585 = vsel %vm472, %v521, -inf
    %v586 = vsel %vm473, %v522, -inf
    %v587 = vsel %vm470, %v523, -inf
    %v588 = vsel %vm471, %v524, -inf
    %v589 = vsel %vm472, %v525, -inf
    %v590 = vsel %vm473, %v526, -inf
    %v591 = vsel %vm470, %v527, -inf
    %v592 = vsel %vm471, %v528, -inf
    %v593 = vsel %vm472, %v529, -inf
    %v594 = vsel %vm473, %v530, -inf
    %v595 = vsel %vm470, %v531, -inf
    %v596 = vsel %vm471, %v532, -inf
    %v597 = vsel %vm472, %v533, -inf
    %v598 = vsel %vm473, %v534, -inf
    %v599 = vsel %vm470, %v535, -inf
    %v600 = vsel %vm471, %v536, -inf
    %v601 = vsel %vm472, %v537, -inf
    %v602 = vsel %vm473, %v538, -inf
    %v603 = vsel %vm470, %v539, -inf
    %v604 = vsel %vm471, %v540, -inf
    %v605 = vsel %vm472, %v541, -inf
    %v606 = vsel %vm473, %v542, -inf
    %v607 = vsel %vm470, %v543, -inf
    %v608 = vsel %vm471, %v544, -inf
    %v609 = vsel %vm472, %v545, -inf
    %v610 = vsel %vm473, %v546, -inf
    %v611 = vmax.f32 %v547, %v548
    %v612 = vmax.f32 %v611, %v549
    %v613 = vmax.f32 %v612, %v550
    %614 = vmax.xlane.f32.xlu0 %v613
    %v615 = vpop.xlane.xlu0 %614
    %v616 = vmax.f32 %v551, %v552
    %v617 = vmax.f32 %v616, %v553
    %v618 = vmax.f32 %v617, %v554
    %619 = vmax.xlane.f32.xlu0 %v618
    %v620 = vpop.xlane.xlu0 %619
    %v621 = vmax.f32 %v555, %v556
    %v622 = vmax.f32 %v621, %v557
    %v623 = vmax.f32 %v622, %v558
    %624 = vmax.xlane.f32.xlu0 %v623
    %v625 = vpop.xlane.xlu0 %624
    %v626 = vmax.f32 %v559, %v560
    %v627 = vmax.f32 %v626, %v561
    %v628 = vmax.f32 %v627, %v562
    %629 = vmax.xlane.f32.xlu0 %v628
    %v630 = vpop.xlane.xlu0 %629
    %v631 = vmax.f32 %v563, %v564
    %v632 = vmax.f32 %v631, %v565
    %v633 = vmax.f32 %v632, %v566
    %634 = vmax.xlane.f32.xlu0 %v633
    %v635 = vpop.xlane.xlu0 %634
    %v636 = vmax.f32 %v567, %v568
    %v637 = vmax.f32 %v636, %v569
    %v638 = vmax.f32 %v637, %v570
    %639 = vmax.xlane.f32.xlu0 %v638
    %v640 = vpop.xlane.xlu0 %639
    %v641 = vmax.f32 %v571, %v572
    %v642 = vmax.f32 %v641, %v573
    %v643 = vmax.f32 %v642, %v574
    %644 = vmax.xlane.f32.xlu0 %v643
    %v645 = vpop.xlane.xlu0 %644
    %v646 = vmax.f32 %v575, %v576
    %v647 = vmax.f32 %v646, %v577
    %v648 = vmax.f32 %v647, %v578
    %649 = vmax.xlane.f32.xlu0 %v648
    %v650 = vpop.xlane.xlu0 %649
    %v651 = vmax.f32 %v579, %v580
    %v652 = vmax.f32 %v651, %v581
    %v653 = vmax.f32 %v652, %v582
    %654 = vmax.xlane.f32.xlu0 %v653
    %v655 = vpop.xlane.xlu0 %654
    %v656 = vmax.f32 %v583, %v584
    %v657 = vmax.f32 %v656, %v585
    %v658 = vmax.f32 %v657, %v586
    %659 = vmax.xlane.f32.xlu0 %v658
    %v660 = vpop.xlane.xlu0 %659
    %v661 = vmax.f32 %v587, %v588
    %v662 = vmax.f32 %v661, %v589
    %v663 = vmax.f32 %v662, %v590
    %664 = vmax.xlane.f32.xlu0 %v663
    %v665 = vpop.xlane.xlu0 %664
    %v666 = vmax.f32 %v591, %v592
    %v667 = vmax.f32 %v666, %v593
    %v668 = vmax.f32 %v667, %v594
    %669 = vmax.xlane.f32.xlu0 %v668
    %v670 = vpop.xlane.xlu0 %669
    %v671 = vmax.f32 %v595, %v596
    %v672 = vmax.f32 %v671, %v597
    %v673 = vmax.f32 %v672, %v598
    %674 = vmax.xlane.f32.xlu0 %v673
    %v675 = vpop.xlane.xlu0 %674
    %v676 = vmax.f32 %v599, %v600
    %v677 = vmax.f32 %v676, %v601
    %v678 = vmax.f32 %v677, %v602
    %679 = vmax.xlane.f32.xlu0 %v678
    %v680 = vpop.xlane.xlu0 %679
    %v681 = vmax.f32 %v603, %v604
    %v682 = vmax.f32 %v681, %v605
    %v683 = vmax.f32 %v682, %v606
    %684 = vmax.xlane.f32.xlu0 %v683
    %v685 = vpop.xlane.xlu0 %684
    %v686 = vmax.f32 %v607, %v608
    %v687 = vmax.f32 %v686, %v609
    %v688 = vmax.f32 %v687, %v610
    %689 = vmax.xlane.f32.xlu0 %v688
    %v690 = vpop.xlane.xlu0 %689
    %vm691 = vcmp.eq.f32.partialorder %v547, %v615
    %vm692 = vcmp.eq.f32.partialorder %v548, %v615
    %vm693 = vcmp.eq.f32.partialorder %v549, %v615
    %vm694 = vcmp.eq.f32.partialorder %v550, %v615
    %vm695 = vcmp.eq.f32.partialorder %v551, %v620
    %vm696 = vcmp.eq.f32.partialorder %v552, %v620
    %vm697 = vcmp.eq.f32.partialorder %v553, %v620
    %vm698 = vcmp.eq.f32.partialorder %v554, %v620
    %vm699 = vcmp.eq.f32.partialorder %v555, %v625
    %vm700 = vcmp.eq.f32.partialorder %v556, %v625
    %vm701 = vcmp.eq.f32.partialorder %v557, %v625
    %vm702 = vcmp.eq.f32.partialorder %v558, %v625
    %vm703 = vcmp.eq.f32.partialorder %v559, %v630
    %vm704 = vcmp.eq.f32.partialorder %v560, %v630
    %vm705 = vcmp.eq.f32.partialorder %v561, %v630
    %vm706 = vcmp.eq.f32.partialorder %v562, %v630
    %vm707 = vcmp.eq.f32.partialorder %v563, %v635
    %vm708 = vcmp.eq.f32.partialorder %v564, %v635
    %vm709 = vcmp.eq.f32.partialorder %v565, %v635
    %vm710 = vcmp.eq.f32.partialorder %v566, %v635
    %vm711 = vcmp.eq.f32.partialorder %v567, %v640
    %vm712 = vcmp.eq.f32.partialorder %v568, %v640
    %vm713 = vcmp.eq.f32.partialorder %v569, %v640
    %vm714 = vcmp.eq.f32.partialorder %v570, %v640
    %vm715 = vcmp.eq.f32.partialorder %v571, %v645
    %vm716 = vcmp.eq.f32.partialorder %v572, %v645
    %vm717 = vcmp.eq.f32.partialorder %v573, %v645
    %vm718 = vcmp.eq.f32.partialorder %v574, %v645
    %vm719 = vcmp.eq.f32.partialorder %v575, %v650
    %vm720 = vcmp.eq.f32.partialorder %v576, %v650
    %vm721 = vcmp.eq.f32.partialorder %v577, %v650
    %vm722 = vcmp.eq.f32.partialorder %v578, %v650
    %vm723 = vcmp.eq.f32.partialorder %v579, %v655
    %vm724 = vcmp.eq.f32.partialorder %v580, %v655
    %vm725 = vcmp.eq.f32.partialorder %v581, %v655
    %vm726 = vcmp.eq.f32.partialorder %v582, %v655
    %vm727 = vcmp.eq.f32.partialorder %v583, %v660
    %vm728 = vcmp.eq.f32.partialorder %v584, %v660
    %vm729 = vcmp.eq.f32.partialorder %v585, %v660
    %vm730 = vcmp.eq.f32.partialorder %v586, %v660
    %vm731 = vcmp.eq.f32.partialorder %v587, %v665
    %vm732 = vcmp.eq.f32.partialorder %v588, %v665
    %vm733 = vcmp.eq.f32.partialorder %v589, %v665
    %vm734 = vcmp.eq.f32.partialorder %v590, %v665
    %vm735 = vcmp.eq.f32.partialorder %v591, %v670
    %vm736 = vcmp.eq.f32.partialorder %v592, %v670
    %vm737 = vcmp.eq.f32.partialorder %v593, %v670
    %vm738 = vcmp.eq.f32.partialorder %v594, %v670
    %vm739 = vcmp.eq.f32.partialorder %v595, %v675
    %vm740 = vcmp.eq.f32.partialorder %v596, %v675
    %vm741 = vcmp.eq.f32.partialorder %v597, %v675
    %vm742 = vcmp.eq.f32.partialorder %v598, %v675
    %vm743 = vcmp.eq.f32.partialorder %v599, %v680
    %vm744 = vcmp.eq.f32.partialorder %v600, %v680
    %vm745 = vcmp.eq.f32.partialorder %v601, %v680
    %vm746 = vcmp.eq.f32.partialorder %v602, %v680
    %vm747 = vcmp.eq.f32.partialorder %v603, %v685
    %vm748 = vcmp.eq.f32.partialorder %v604, %v685
    %vm749 = vcmp.eq.f32.partialorder %v605, %v685
    %vm750 = vcmp.eq.f32.partialorder %v606, %v685
    %vm751 = vcmp.eq.f32.partialorder %v607, %v690
    %vm752 = vcmp.eq.f32.partialorder %v608, %v690
    %vm753 = vcmp.eq.f32.partialorder %v609, %v690
    %vm754 = vcmp.eq.f32.partialorder %v610, %v690
    %v755 = vsel %vm691, %v460, 512
    %v756 = vsel %vm692, %v461, 512
    %v757 = vsel %vm693, %v462, 512
    %v758 = vsel %vm694, %v463, 512
    %v759 = vsel %vm695, %v460, 512
    %v760 = vsel %vm696, %v461, 512
    %v761 = vsel %vm697, %v462, 512
    %v762 = vsel %vm698, %v463, 512
    %v763 = vsel %vm699, %v460, 512
    %v764 = vsel %vm700, %v461, 512
    %v765 = vsel %vm701, %v462, 512
    %v766 = vsel %vm702, %v463, 512
    %v767 = vsel %vm703, %v460, 512
    %v768 = vsel %vm704, %v461, 512
    %v769 = vsel %vm705, %v462, 512
    %v770 = vsel %vm706, %v463, 512
    %v771 = vsel %vm707, %v460, 512
    %v772 = vsel %vm708, %v461, 512
    %v773 = vsel %vm709, %v462, 512
    %v774 = vsel %vm710, %v463, 512
    %v775 = vsel %vm711, %v460, 512
    %v776 = vsel %vm712, %v461, 512
    %v777 = vsel %vm713, %v462, 512
    %v778 = vsel %vm714, %v463, 512
    %v779 = vsel %vm715, %v460, 512
    %v780 = vsel %vm716, %v461, 512
    %v781 = vsel %vm717, %v462, 512
    %v782 = vsel %vm718, %v463, 512
    %v783 = vsel %vm719, %v460, 512
    %v784 = vsel %vm720, %v461, 512
    %v785 = vsel %vm721, %v462, 512
    %v786 = vsel %vm722, %v463, 512
    %v787 = vsel %vm723, %v460, 512
    %v788 = vsel %vm724, %v461, 512
    %v789 = vsel %vm725, %v462, 512
    %v790 = vsel %vm726, %v463, 512
    %v791 = vsel %vm727, %v460, 512
    %v792 = vsel %vm728, %v461, 512
    %v793 = vsel %vm729, %v462, 512
    %v794 = vsel %vm730, %v463, 512
    %v795 = vsel %vm731, %v460, 512
    %v796 = vsel %vm732, %v461, 512
    %v797 = vsel %vm733, %v462, 512
    %v798 = vsel %vm734, %v463, 512
    %v799 = vsel %vm735, %v460, 512
    %v800 = vsel %vm736, %v461, 512
    %v801 = vsel %vm737, %v462, 512
    %v802 = vsel %vm738, %v463, 512
    %v803 = vsel %vm739, %v460, 512
    %v804 = vsel %vm740, %v461, 512
    %v805 = vsel %vm741, %v462, 512
    %v806 = vsel %vm742, %v463, 512
    %v807 = vsel %vm743, %v460, 512
    %v808 = vsel %vm744, %v461, 512
    %v809 = vsel %vm745, %v462, 512
    %v810 = vsel %vm746, %v463, 512
    %v811 = vsel %vm747, %v460, 512
    %v812 = vsel %vm748, %v461, 512
    %v813 = vsel %vm749, %v462, 512
    %v814 = vsel %vm750, %v463, 512
    %v815 = vsel %vm751, %v460, 512
    %v816 = vsel %vm752, %v461, 512
    %v817 = vsel %vm753, %v462, 512
    %v818 = vsel %vm754, %v463, 512
    %vm819 = vcmp.lt.s32.totalorder %v755, %v756
    %v820 = vsel %vm819, %v755, %v756
    %vm821 = vcmp.lt.s32.totalorder %v820, %v757
    %v822 = vsel %vm821, %v820, %v757
    %vm823 = vcmp.lt.s32.totalorder %v822, %v758
    %v824 = vsel %vm823, %v822, %v758
    %v825 = vand.u32 %v824, 65535
    %v826 = vshra.s32 %v824, 16
    %v827 = vcvt.s32.f32 %v825
    %v828 = vcvt.s32.f32 %v826
    %829 = vmin.xlane.f32.xlu0 %v828
    %v830 = vpop.xlane.xlu0 %829
    %vm831 = vcmp.eq.f32.partialorder %v828, %v830
    %v832 = vsel %vm831, %v827, inf
    %833 = vmin.xlane.f32.xlu0 %v832
    %v834 = vpop.xlane.xlu0 %833
    %v835 = vcvt.f32.s32 %v834
    %v836 = vcvt.f32.s32 %v830
    %v837 = vshll.u32 %v836, 16
    %v838 = vadd.s32 %v837, %v835
    %vm839 = vcmp.lt.s32.totalorder %v759, %v760
    %v840 = vsel %vm839, %v759, %v760
    %vm841 = vcmp.lt.s32.totalorder %v840, %v761
    %v842 = vsel %vm841, %v840, %v761
    %vm843 = vcmp.lt.s32.totalorder %v842, %v762
    %v844 = vsel %vm843, %v842, %v762
    %v845 = vand.u32 %v844, 65535
    %v846 = vshra.s32 %v844, 16
    %v847 = vcvt.s32.f32 %v845
    %v848 = vcvt.s32.f32 %v846
    %849 = vmin.xlane.f32.xlu0 %v848
    %v850 = vpop.xlane.xlu0 %849
    %vm851 = vcmp.eq.f32.partialorder %v848, %v850
    %v852 = vsel %vm851, %v847, inf
    %853 = vmin.xlane.f32.xlu0 %v852
    %v854 = vpop.xlane.xlu0 %853
    %v855 = vcvt.f32.s32 %v854
    %v856 = vcvt.f32.s32 %v850
    %v857 = vshll.u32 %v856, 16
    %v858 = vadd.s32 %v857, %v855
    %vm859 = vcmp.lt.s32.totalorder %v763, %v764
    %v860 = vsel %vm859, %v763, %v764
    %vm861 = vcmp.lt.s32.totalorder %v860, %v765
    %v862 = vsel %vm861, %v860, %v765
    %vm863 = vcmp.lt.s32.totalorder %v862, %v766
    %v864 = vsel %vm863, %v862, %v766
    %v865 = vand.u32 %v864, 65535
    %v866 = vshra.s32 %v864, 16
    %v867 = vcvt.s32.f32 %v865
    %v868 = vcvt.s32.f32 %v866
    %869 = vmin.xlane.f32.xlu0 %v868
    %v870 = vpop.xlane.xlu0 %869
    %vm871 = vcmp.eq.f32.partialorder %v868, %v870
    %v872 = vsel %vm871, %v867, inf
    %873 = vmin.xlane.f32.xlu0 %v872
    %v874 = vpop.xlane.xlu0 %873
    %v875 = vcvt.f32.s32 %v874
    %v876 = vcvt.f32.s32 %v870
    %v877 = vshll.u32 %v876, 16
    %v878 = vadd.s32 %v877, %v875
    %vm879 = vcmp.lt.s32.totalorder %v767, %v768
    %v880 = vsel %vm879, %v767, %v768
    %vm881 = vcmp.lt.s32.totalorder %v880, %v769
    %v882 = vsel %vm881, %v880, %v769
    %vm883 = vcmp.lt.s32.totalorder %v882, %v770
    %v884 = vsel %vm883, %v882, %v770
    %v885 = vand.u32 %v884, 65535
    %v886 = vshra.s32 %v884, 16
    %v887 = vcvt.s32.f32 %v885
    %v888 = vcvt.s32.f32 %v886
    %889 = vmin.xlane.f32.xlu0 %v888
    %v890 = vpop.xlane.xlu0 %889
    %vm891 = vcmp.eq.f32.partialorder %v888, %v890
    %v892 = vsel %vm891, %v887, inf
    %893 = vmin.xlane.f32.xlu0 %v892
    %v894 = vpop.xlane.xlu0 %893
    %v895 = vcvt.f32.s32 %v894
    %v896 = vcvt.f32.s32 %v890
    %v897 = vshll.u32 %v896, 16
    %v898 = vadd.s32 %v897, %v895
    %vm899 = vcmp.lt.s32.totalorder %v771, %v772
    %v900 = vsel %vm899, %v771, %v772
    %vm901 = vcmp.lt.s32.totalorder %v900, %v773
    %v902 = vsel %vm901, %v900, %v773
    %vm903 = vcmp.lt.s32.totalorder %v902, %v774
    %v904 = vsel %vm903, %v902, %v774
    %v905 = vand.u32 %v904, 65535
    %v906 = vshra.s32 %v904, 16
    %v907 = vcvt.s32.f32 %v905
    %v908 = vcvt.s32.f32 %v906
    %909 = vmin.xlane.f32.xlu0 %v908
    %v910 = vpop.xlane.xlu0 %909
    %vm911 = vcmp.eq.f32.partialorder %v908, %v910
    %v912 = vsel %vm911, %v907, inf
    %913 = vmin.xlane.f32.xlu0 %v912
    %v914 = vpop.xlane.xlu0 %913
    %v915 = vcvt.f32.s32 %v914
    %v916 = vcvt.f32.s32 %v910
    %v917 = vshll.u32 %v916, 16
    %v918 = vadd.s32 %v917, %v915
    %vm919 = vcmp.lt.s32.totalorder %v775, %v776
    %v920 = vsel %vm919, %v775, %v776
    %vm921 = vcmp.lt.s32.totalorder %v920, %v777
    %v922 = vsel %vm921, %v920, %v777
    %vm923 = vcmp.lt.s32.totalorder %v922, %v778
    %v924 = vsel %vm923, %v922, %v778
    %v925 = vand.u32 %v924, 65535
    %v926 = vshra.s32 %v924, 16
    %v927 = vcvt.s32.f32 %v925
    %v928 = vcvt.s32.f32 %v926
    %929 = vmin.xlane.f32.xlu0 %v928
    %v930 = vpop.xlane.xlu0 %929
    %vm931 = vcmp.eq.f32.partialorder %v928, %v930
    %v932 = vsel %vm931, %v927, inf
    %933 = vmin.xlane.f32.xlu0 %v932
    %v934 = vpop.xlane.xlu0 %933
    %v935 = vcvt.f32.s32 %v934
    %v936 = vcvt.f32.s32 %v930
    %v937 = vshll.u32 %v936, 16
    %v938 = vadd.s32 %v937, %v935
    %vm939 = vcmp.lt.s32.totalorder %v779, %v780
    %v940 = vsel %vm939, %v779, %v780
    %vm941 = vcmp.lt.s32.totalorder %v940, %v781
    %v942 = vsel %vm941, %v940, %v781
    %vm943 = vcmp.lt.s32.totalorder %v942, %v782
    %v944 = vsel %vm943, %v942, %v782
    %v945 = vand.u32 %v944, 65535
    %v946 = vshra.s32 %v944, 16
    %v947 = vcvt.s32.f32 %v945
    %v948 = vcvt.s32.f32 %v946
    %949 = vmin.xlane.f32.xlu0 %v948
    %v950 = vpop.xlane.xlu0 %949
    %vm951 = vcmp.eq.f32.partialorder %v948, %v950
    %v952 = vsel %vm951, %v947, inf
    %953 = vmin.xlane.f32.xlu0 %v952
    %v954 = vpop.xlane.xlu0 %953
    %v955 = vcvt.f32.s32 %v954
    %v956 = vcvt.f32.s32 %v950
    %v957 = vshll.u32 %v956, 16
    %v958 = vadd.s32 %v957, %v955
    %vm959 = vcmp.lt.s32.totalorder %v783, %v784
    %v960 = vsel %vm959, %v783, %v784
    %vm961 = vcmp.lt.s32.totalorder %v960, %v785
    %v962 = vsel %vm961, %v960, %v785
    %vm963 = vcmp.lt.s32.totalorder %v962, %v786
    %v964 = vsel %vm963, %v962, %v786
    %v965 = vand.u32 %v964, 65535
    %v966 = vshra.s32 %v964, 16
    %v967 = vcvt.s32.f32 %v965
    %v968 = vcvt.s32.f32 %v966
    %969 = vmin.xlane.f32.xlu0 %v968
    %v970 = vpop.xlane.xlu0 %969
    %vm971 = vcmp.eq.f32.partialorder %v968, %v970
    %v972 = vsel %vm971, %v967, inf
    %973 = vmin.xlane.f32.xlu0 %v972
    %v974 = vpop.xlane.xlu0 %973
    %v975 = vcvt.f32.s32 %v974
    %v976 = vcvt.f32.s32 %v970
    %v977 = vshll.u32 %v976, 16
    %v978 = vadd.s32 %v977, %v975
    %vm979 = vcmp.lt.s32.totalorder %v787, %v788
    %v980 = vsel %vm979, %v787, %v788
    %vm981 = vcmp.lt.s32.totalorder %v980, %v789
    %v982 = vsel %vm981, %v980, %v789
    %vm983 = vcmp.lt.s32.totalorder %v982, %v790
    %v984 = vsel %vm983, %v982, %v790
    %v985 = vand.u32 %v984, 65535
    %v986 = vshra.s32 %v984, 16
    %v987 = vcvt.s32.f32 %v985
    %v988 = vcvt.s32.f32 %v986
    %989 = vmin.xlane.f32.xlu0 %v988
    %v990 = vpop.xlane.xlu0 %989
    %vm991 = vcmp.eq.f32.partialorder %v988, %v990
    %v992 = vsel %vm991, %v987, inf
    %993 = vmin.xlane.f32.xlu0 %v992
    %v994 = vpop.xlane.xlu0 %993
    %v995 = vcvt.f32.s32 %v994
    %v996 = vcvt.f32.s32 %v990
    %v997 = vshll.u32 %v996, 16
    %v998 = vadd.s32 %v997, %v995
    %vm999 = vcmp.lt.s32.totalorder %v791, %v792
    %v1000 = vsel %vm999, %v791, %v792
    %vm1001 = vcmp.lt.s32.totalorder %v1000, %v793
    %v1002 = vsel %vm1001, %v1000, %v793
    %vm1003 = vcmp.lt.s32.totalorder %v1002, %v794
    %v1004 = vsel %vm1003, %v1002, %v794
    %v1005 = vand.u32 %v1004, 65535
    %v1006 = vshra.s32 %v1004, 16
    %v1007 = vcvt.s32.f32 %v1005
    %v1008 = vcvt.s32.f32 %v1006
    %1009 = vmin.xlane.f32.xlu0 %v1008
    %v1010 = vpop.xlane.xlu0 %1009
    %vm1011 = vcmp.eq.f32.partialorder %v1008, %v1010
    %v1012 = vsel %vm1011, %v1007, inf
    %1013 = vmin.xlane.f32.xlu0 %v1012
    %v1014 = vpop.xlane.xlu0 %1013
    %v1015 = vcvt.f32.s32 %v1014
    %v1016 = vcvt.f32.s32 %v1010
    %v1017 = vshll.u32 %v1016, 16
    %v1018 = vadd.s32 %v1017, %v1015
    %vm1019 = vcmp.lt.s32.totalorder %v795, %v796
    %v1020 = vsel %vm1019, %v795, %v796
    %vm1021 = vcmp.lt.s32.totalorder %v1020, %v797
    %v1022 = vsel %vm1021, %v1020, %v797
    %vm1023 = vcmp.lt.s32.totalorder %v1022, %v798
    %v1024 = vsel %vm1023, %v1022, %v798
    %v1025 = vand.u32 %v1024, 65535
    %v1026 = vshra.s32 %v1024, 16
    %v1027 = vcvt.s32.f32 %v1025
    %v1028 = vcvt.s32.f32 %v1026
    %1029 = vmin.xlane.f32.xlu0 %v1028
    %v1030 = vpop.xlane.xlu0 %1029
    %vm1031 = vcmp.eq.f32.partialorder %v1028, %v1030
    %v1032 = vsel %vm1031, %v1027, inf
    %1033 = vmin.xlane.f32.xlu0 %v1032
    %v1034 = vpop.xlane.xlu0 %1033
    %v1035 = vcvt.f32.s32 %v1034
    %v1036 = vcvt.f32.s32 %v1030
    %v1037 = vshll.u32 %v1036, 16
    %v1038 = vadd.s32 %v1037, %v1035
    %vm1039 = vcmp.lt.s32.totalorder %v799, %v800
    %v1040 = vsel %vm1039, %v799, %v800
    %vm1041 = vcmp.lt.s32.totalorder %v1040, %v801
    %v1042 = vsel %vm1041, %v1040, %v801
    %vm1043 = vcmp.lt.s32.totalorder %v1042, %v802
    %v1044 = vsel %vm1043, %v1042, %v802
    %v1045 = vand.u32 %v1044, 65535
    %v1046 = vshra.s32 %v1044, 16
    %v1047 = vcvt.s32.f32 %v1045
    %v1048 = vcvt.s32.f32 %v1046
    %1049 = vmin.xlane.f32.xlu0 %v1048
    %v1050 = vpop.xlane.xlu0 %1049
    %vm1051 = vcmp.eq.f32.partialorder %v1048, %v1050
    %v1052 = vsel %vm1051, %v1047, inf
    %1053 = vmin.xlane.f32.xlu0 %v1052
    %v1054 = vpop.xlane.xlu0 %1053
    %v1055 = vcvt.f32.s32 %v1054
    %v1056 = vcvt.f32.s32 %v1050
    %v1057 = vshll.u32 %v1056, 16
    %v1058 = vadd.s32 %v1057, %v1055
    %vm1059 = vcmp.lt.s32.totalorder %v803, %v804
    %v1060 = vsel %vm1059, %v803, %v804
    %vm1061 = vcmp.lt.s32.totalorder %v1060, %v805
    %v1062 = vsel %vm1061, %v1060, %v805
    %vm1063 = vcmp.lt.s32.totalorder %v1062, %v806
    %v1064 = vsel %vm1063, %v1062, %v806
    %v1065 = vand.u32 %v1064, 65535
    %v1066 = vshra.s32 %v1064, 16
    %v1067 = vcvt.s32.f32 %v1065
    %v1068 = vcvt.s32.f32 %v1066
    %1069 = vmin.xlane.f32.xlu0 %v1068
    %v1070 = vpop.xlane.xlu0 %1069
    %vm1071 = vcmp.eq.f32.partialorder %v1068, %v1070
    %v1072 = vsel %vm1071, %v1067, inf
    %1073 = vmin.xlane.f32.xlu0 %v1072
    %v1074 = vpop.xlane.xlu0 %1073
    %v1075 = vcvt.f32.s32 %v1074
    %v1076 = vcvt.f32.s32 %v1070
    %v1077 = vshll.u32 %v1076, 16
    %v1078 = vadd.s32 %v1077, %v1075
    %vm1079 = vcmp.lt.s32.totalorder %v807, %v808
    %v1080 = vsel %vm1079, %v807, %v808
    %vm1081 = vcmp.lt.s32.totalorder %v1080, %v809
    %v1082 = vsel %vm1081, %v1080, %v809
    %vm1083 = vcmp.lt.s32.totalorder %v1082, %v810
    %v1084 = vsel %vm1083, %v1082, %v810
    %v1085 = vand.u32 %v1084, 65535
    %v1086 = vshra.s32 %v1084, 16
    %v1087 = vcvt.s32.f32 %v1085
    %v1088 = vcvt.s32.f32 %v1086
    %1089 = vmin.xlane.f32.xlu0 %v1088
    %v1090 = vpop.xlane.xlu0 %1089
    %vm1091 = vcmp.eq.f32.partialorder %v1088, %v1090
    %v1092 = vsel %vm1091, %v1087, inf
    %1093 = vmin.xlane.f32.xlu0 %v1092
    %v1094 = vpop.xlane.xlu0 %1093
    %v1095 = vcvt.f32.s32 %v1094
    %v1096 = vcvt.f32.s32 %v1090
    %v1097 = vshll.u32 %v1096, 16
    %v1098 = vadd.s32 %v1097, %v1095
    %vm1099 = vcmp.lt.s32.totalorder %v811, %v812
    %v1100 = vsel %vm1099, %v811, %v812
    %vm1101 = vcmp.lt.s32.totalorder %v1100, %v813
    %v1102 = vsel %vm1101, %v1100, %v813
    %vm1103 = vcmp.lt.s32.totalorder %v1102, %v814
    %v1104 = vsel %vm1103, %v1102, %v814
    %v1105 = vand.u32 %v1104, 65535
    %v1106 = vshra.s32 %v1104, 16
    %v1107 = vcvt.s32.f32 %v1105
    %v1108 = vcvt.s32.f32 %v1106
    %1109 = vmin.xlane.f32.xlu0 %v1108
    %v1110 = vpop.xlane.xlu0 %1109
    %vm1111 = vcmp.eq.f32.partialorder %v1108, %v1110
    %v1112 = vsel %vm1111, %v1107, inf
    %1113 = vmin.xlane.f32.xlu0 %v1112
    %v1114 = vpop.xlane.xlu0 %1113
    %v1115 = vcvt.f32.s32 %v1114
    %v1116 = vcvt.f32.s32 %v1110
    %v1117 = vshll.u32 %v1116, 16
    %v1118 = vadd.s32 %v1117, %v1115
    %vm1119 = vcmp.lt.s32.totalorder %v815, %v816
    %v1120 = vsel %vm1119, %v815, %v816
    %vm1121 = vcmp.lt.s32.totalorder %v1120, %v817
    %v1122 = vsel %vm1121, %v1120, %v817
    %vm1123 = vcmp.lt.s32.totalorder %v1122, %v818
    %v1124 = vsel %vm1123, %v1122, %v818
    %v1125 = vand.u32 %v1124, 65535
    %v1126 = vshra.s32 %v1124, 16
    %v1127 = vcvt.s32.f32 %v1125
    %v1128 = vcvt.s32.f32 %v1126
    %1129 = vmin.xlane.f32.xlu0 %v1128
    %v1130 = vpop.xlane.xlu0 %1129
    %vm1131 = vcmp.eq.f32.partialorder %v1128, %v1130
    %v1132 = vsel %vm1131, %v1127, inf
    %1133 = vmin.xlane.f32.xlu0 %v1132
    %v1134 = vpop.xlane.xlu0 %1133
    %v1135 = vcvt.f32.s32 %v1134
    %v1136 = vcvt.f32.s32 %v1130
    %v1137 = vshll.u32 %v1136, 16
    %v1138 = vadd.s32 %v1137, %v1135
    %vm1139 = vcmp.eq.s32.totalorder %v460, %v838
    %vm1140 = vcmp.eq.s32.totalorder %v461, %v838
    %vm1141 = vcmp.eq.s32.totalorder %v462, %v838
    %vm1142 = vcmp.eq.s32.totalorder %v463, %v838
    %vm1143 = vcmp.eq.s32.totalorder %v460, %v858
    %vm1144 = vcmp.eq.s32.totalorder %v461, %v858
    %vm1145 = vcmp.eq.s32.totalorder %v462, %v858
    %vm1146 = vcmp.eq.s32.totalorder %v463, %v858
    %vm1147 = vcmp.eq.s32.totalorder %v460, %v878
    %vm1148 = vcmp.eq.s32.totalorder %v461, %v878
    %vm1149 = vcmp.eq.s32.totalorder %v462, %v878
    %vm1150 = vcmp.eq.s32.totalorder %v463, %v878
    %vm1151 = vcmp.eq.s32.totalorder %v460, %v898
    %vm1152 = vcmp.eq.s32.totalorder %v461, %v898
    %vm1153 = vcmp.eq.s32.totalorder %v462, %v898
    %vm1154 = vcmp.eq.s32.totalorder %v463, %v898
    %vm1155 = vcmp.eq.s32.totalorder %v460, %v918
    %vm1156 = vcmp.eq.s32.totalorder %v461, %v918
    %vm1157 = vcmp.eq.s32.totalorder %v462, %v918
    %vm1158 = vcmp.eq.s32.totalorder %v463, %v918
    %vm1159 = vcmp.eq.s32.totalorder %v460, %v938
    %vm1160 = vcmp.eq.s32.totalorder %v461, %v938
    %vm1161 = vcmp.eq.s32.totalorder %v462, %v938
    %vm1162 = vcmp.eq.s32.totalorder %v463, %v938
    %vm1163 = vcmp.eq.s32.totalorder %v460, %v958
    %vm1164 = vcmp.eq.s32.totalorder %v461, %v958
    %vm1165 = vcmp.eq.s32.totalorder %v462, %v958
    %vm1166 = vcmp.eq.s32.totalorder %v463, %v958
    %vm1167 = vcmp.eq.s32.totalorder %v460, %v978
    %vm1168 = vcmp.eq.s32.totalorder %v461, %v978
    %vm1169 = vcmp.eq.s32.totalorder %v462, %v978
    %vm1170 = vcmp.eq.s32.totalorder %v463, %v978
    %vm1171 = vcmp.eq.s32.totalorder %v460, %v998
    %vm1172 = vcmp.eq.s32.totalorder %v461, %v998
    %vm1173 = vcmp.eq.s32.totalorder %v462, %v998
    %vm1174 = vcmp.eq.s32.totalorder %v463, %v998
    %vm1175 = vcmp.eq.s32.totalorder %v460, %v1018
    %vm1176 = vcmp.eq.s32.totalorder %v461, %v1018
    %vm1177 = vcmp.eq.s32.totalorder %v462, %v1018
    %vm1178 = vcmp.eq.s32.totalorder %v463, %v1018
    %vm1179 = vcmp.eq.s32.totalorder %v460, %v1038
    %vm1180 = vcmp.eq.s32.totalorder %v461, %v1038
    %vm1181 = vcmp.eq.s32.totalorder %v462, %v1038
    %vm1182 = vcmp.eq.s32.totalorder %v463, %v1038
    %vm1183 = vcmp.eq.s32.totalorder %v460, %v1058
    %vm1184 = vcmp.eq.s32.totalorder %v461, %v1058
    %vm1185 = vcmp.eq.s32.totalorder %v462, %v1058
    %vm1186 = vcmp.eq.s32.totalorder %v463, %v1058
    %vm1187 = vcmp.eq.s32.totalorder %v460, %v1078
    %vm1188 = vcmp.eq.s32.totalorder %v461, %v1078
    %vm1189 = vcmp.eq.s32.totalorder %v462, %v1078
    %vm1190 = vcmp.eq.s32.totalorder %v463, %v1078
    %vm1191 = vcmp.eq.s32.totalorder %v460, %v1098
    %vm1192 = vcmp.eq.s32.totalorder %v461, %v1098
    %vm1193 = vcmp.eq.s32.totalorder %v462, %v1098
    %vm1194 = vcmp.eq.s32.totalorder %v463, %v1098
    %vm1195 = vcmp.eq.s32.totalorder %v460, %v1118
    %vm1196 = vcmp.eq.s32.totalorder %v461, %v1118
    %vm1197 = vcmp.eq.s32.totalorder %v462, %v1118
    %vm1198 = vcmp.eq.s32.totalorder %v463, %v1118
    %vm1199 = vcmp.eq.s32.totalorder %v460, %v1138
    %vm1200 = vcmp.eq.s32.totalorder %v461, %v1138
    %vm1201 = vcmp.eq.s32.totalorder %v462, %v1138
    %vm1202 = vcmp.eq.s32.totalorder %v463, %v1138
    %v1203 = vsel %vm1139, 1, 0
    %v1204 = vsel %vm1140, 1, 0
    %v1205 = vsel %vm1141, 1, 0
    %v1206 = vsel %vm1142, 1, 0
    %v1207 = vsel %vm1143, 1, 0
    %v1208 = vsel %vm1144, 1, 0
    %v1209 = vsel %vm1145, 1, 0
    %v1210 = vsel %vm1146, 1, 0
    %v1211 = vsel %vm1147, 1, 0
    %v1212 = vsel %vm1148, 1, 0
    %v1213 = vsel %vm1149, 1, 0
    %v1214 = vsel %vm1150, 1, 0
    %v1215 = vsel %vm1151, 1, 0
    %v1216 = vsel %vm1152, 1, 0
    %v1217 = vsel %vm1153, 1, 0
    %v1218 = vsel %vm1154, 1, 0
    %v1219 = vsel %vm1155, 1, 0
    %v1220 = vsel %vm1156, 1, 0
    %v1221 = vsel %vm1157, 1, 0
    %v1222 = vsel %vm1158, 1, 0
    %v1223 = vsel %vm1159, 1, 0
    %v1224 = vsel %vm1160, 1, 0
    %v1225 = vsel %vm1161, 1, 0
    %v1226 = vsel %vm1162, 1, 0
    %v1227 = vsel %vm1163, 1, 0
    %v1228 = vsel %vm1164, 1, 0
    %v1229 = vsel %vm1165, 1, 0
    %v1230 = vsel %vm1166, 1, 0
    %v1231 = vsel %vm1167, 1, 0
    %v1232 = vsel %vm1168, 1, 0
    %v1233 = vsel %vm1169, 1, 0
    %v1234 = vsel %vm1170, 1, 0
    %v1235 = vsel %vm1171, 1, 0
    %v1236 = vsel %vm1172, 1, 0
    %v1237 = vsel %vm1173, 1, 0
    %v1238 = vsel %vm1174, 1, 0
    %v1239 = vsel %vm1175, 1, 0
    %v1240 = vsel %vm1176, 1, 0
    %v1241 = vsel %vm1177, 1, 0
    %v1242 = vsel %vm1178, 1, 0
    %v1243 = vsel %vm1179, 1, 0
    %v1244 = vsel %vm1180, 1, 0
    %v1245 = vsel %vm1181, 1, 0
    %v1246 = vsel %vm1182, 1, 0
    %v1247 = vsel %vm1183, 1, 0
    %v1248 = vsel %vm1184, 1, 0
    %v1249 = vsel %vm1185, 1, 0
    %v1250 = vsel %vm1186, 1, 0
    %v1251 = vsel %vm1187, 1, 0
    %v1252 = vsel %vm1188, 1, 0
    %v1253 = vsel %vm1189, 1, 0
    %v1254 = vsel %vm1190, 1, 0
    %v1255 = vsel %vm1191, 1, 0
    %v1256 = vsel %vm1192, 1, 0
    %v1257 = vsel %vm1193, 1, 0
    %v1258 = vsel %vm1194, 1, 0
    %v1259 = vsel %vm1195, 1, 0
    %v1260 = vsel %vm1196, 1, 0
    %v1261 = vsel %vm1197, 1, 0
    %v1262 = vsel %vm1198, 1, 0
    %v1263 = vsel %vm1199, 1, 0
    %v1264 = vsel %vm1200, 1, 0
    %v1265 = vsel %vm1201, 1, 0
    %v1266 = vsel %vm1202, 1, 0
    %v1267 = vcvt.s32.f32 %v1203
    %v1268 = vcvt.s32.f32 %v1204
    %v1269 = vcvt.s32.f32 %v1205
    %v1270 = vcvt.s32.f32 %v1206
    %v1271 = vcvt.s32.f32 %v1207
    %v1272 = vcvt.s32.f32 %v1208
    %v1273 = vcvt.s32.f32 %v1209
    %v1274 = vcvt.s32.f32 %v1210
    %v1275 = vcvt.s32.f32 %v1211
    %v1276 = vcvt.s32.f32 %v1212
    %v1277 = vcvt.s32.f32 %v1213
    %v1278 = vcvt.s32.f32 %v1214
    %v1279 = vcvt.s32.f32 %v1215
    %v1280 = vcvt.s32.f32 %v1216
    %v1281 = vcvt.s32.f32 %v1217
    %v1282 = vcvt.s32.f32 %v1218
    %v1283 = vcvt.s32.f32 %v1219
    %v1284 = vcvt.s32.f32 %v1220
    %v1285 = vcvt.s32.f32 %v1221
    %v1286 = vcvt.s32.f32 %v1222
    %v1287 = vcvt.s32.f32 %v1223
    %v1288 = vcvt.s32.f32 %v1224
    %v1289 = vcvt.s32.f32 %v1225
    %v1290 = vcvt.s32.f32 %v1226
    %v1291 = vcvt.s32.f32 %v1227
    %v1292 = vcvt.s32.f32 %v1228
    %v1293 = vcvt.s32.f32 %v1229
    %v1294 = vcvt.s32.f32 %v1230
    %v1295 = vcvt.s32.f32 %v1231
    %v1296 = vcvt.s32.f32 %v1232
    %v1297 = vcvt.s32.f32 %v1233
    %v1298 = vcvt.s32.f32 %v1234
    %v1299 = vcvt.s32.f32 %v1235
    %v1300 = vcvt.s32.f32 %v1236
    %v1301 = vcvt.s32.f32 %v1237
    %v1302 = vcvt.s32.f32 %v1238
    %v1303 = vcvt.s32.f32 %v1239
    %v1304 = vcvt.s32.f32 %v1240
    %v1305 = vcvt.s32.f32 %v1241
    %v1306 = vcvt.s32.f32 %v1242
    %v1307 = vcvt.s32.f32 %v1243
    %v1308 = vcvt.s32.f32 %v1244
    %v1309 = vcvt.s32.f32 %v1245
    %v1310 = vcvt.s32.f32 %v1246
    %v1311 = vcvt.s32.f32 %v1247
    %v1312 = vcvt.s32.f32 %v1248
    %v1313 = vcvt.s32.f32 %v1249
    %v1314 = vcvt.s32.f32 %v1250
    %v1315 = vcvt.s32.f32 %v1251
    %v1316 = vcvt.s32.f32 %v1252
    %v1317 = vcvt.s32.f32 %v1253
    %v1318 = vcvt.s32.f32 %v1254
    %v1319 = vcvt.s32.f32 %v1255
    %v1320 = vcvt.s32.f32 %v1256
    %v1321 = vcvt.s32.f32 %v1257
    %v1322 = vcvt.s32.f32 %v1258
    %v1323 = vcvt.s32.f32 %v1259
    %v1324 = vcvt.s32.f32 %v1260
    %v1325 = vcvt.s32.f32 %v1261
    %v1326 = vcvt.s32.f32 %v1262
    %v1327 = vcvt.s32.f32 %v1263
    %v1328 = vcvt.s32.f32 %v1264
    %v1329 = vcvt.s32.f32 %v1265
    %v1330 = vcvt.s32.f32 %v1266
    %v1332 = vperm.slane %v198, 0
    %v1333 = vperm.slane %v198, 1
    %v1334 = vperm.slane %v198, 2
    %v1335 = vperm.slane %v198, 3
    %v1340 = vmul.f32 %v1332, %v1267
    %v1341 = vmul.f32 %v1333, %v1268
    %v1342 = vmul.f32 %v1334, %v1269
    %v1343 = vmul.f32 %v1335, %v1270
    %v1344 = vmul.f32 %v1332, %v1271
    %v1345 = vmul.f32 %v1333, %v1272
    %v1346 = vmul.f32 %v1334, %v1273
    %v1347 = vmul.f32 %v1335, %v1274
    %v1348 = vmul.f32 %v1332, %v1275
    %v1349 = vmul.f32 %v1333, %v1276
    %v1350 = vmul.f32 %v1334, %v1277
    %v1351 = vmul.f32 %v1335, %v1278
    %v1352 = vmul.f32 %v1332, %v1279
    %v1353 = vmul.f32 %v1333, %v1280
    %v1354 = vmul.f32 %v1334, %v1281
    %v1355 = vmul.f32 %v1335, %v1282
    %v1356 = vmul.f32 %v1332, %v1283
    %v1357 = vmul.f32 %v1333, %v1284
    %v1358 = vmul.f32 %v1334, %v1285
    %v1359 = vmul.f32 %v1335, %v1286
    %v1360 = vmul.f32 %v1332, %v1287
    %v1361 = vmul.f32 %v1333, %v1288
    %v1362 = vmul.f32 %v1334, %v1289
    %v1363 = vmul.f32 %v1335, %v1290
    %v1364 = vmul.f32 %v1332, %v1291
    %v1365 = vmul.f32 %v1333, %v1292
    %v1366 = vmul.f32 %v1334, %v1293
    %v1367 = vmul.f32 %v1335, %v1294
    %v1368 = vmul.f32 %v1332, %v1295
    %v1369 = vmul.f32 %v1333, %v1296
    %v1370 = vmul.f32 %v1334, %v1297
    %v1371 = vmul.f32 %v1335, %v1298
    %v1372 = vmul.f32 %v1332, %v1299
    %v1373 = vmul.f32 %v1333, %v1300
    %v1374 = vmul.f32 %v1334, %v1301
    %v1375 = vmul.f32 %v1335, %v1302
    %v1376 = vmul.f32 %v1332, %v1303
    %v1377 = vmul.f32 %v1333, %v1304
    %v1378 = vmul.f32 %v1334, %v1305
    %v1379 = vmul.f32 %v1335, %v1306
    %v1380 = vmul.f32 %v1332, %v1307
    %v1381 = vmul.f32 %v1333, %v1308
    %v1382 = vmul.f32 %v1334, %v1309
    %v1383 = vmul.f32 %v1335, %v1310
    %v1384 = vmul.f32 %v1332, %v1311
    %v1385 = vmul.f32 %v1333, %v1312
    %v1386 = vmul.f32 %v1334, %v1313
    %v1387 = vmul.f32 %v1335, %v1314
    %v1388 = vmul.f32 %v1332, %v1315
    %v1389 = vmul.f32 %v1333, %v1316
    %v1390 = vmul.f32 %v1334, %v1317
    %v1391 = vmul.f32 %v1335, %v1318
    %v1392 = vmul.f32 %v1332, %v1319
    %v1393 = vmul.f32 %v1333, %v1320
    %v1394 = vmul.f32 %v1334, %v1321
    %v1395 = vmul.f32 %v1335, %v1322
    %v1396 = vmul.f32 %v1332, %v1323
    %v1397 = vmul.f32 %v1333, %v1324
    %v1398 = vmul.f32 %v1334, %v1325
    %v1399 = vmul.f32 %v1335, %v1326
    %v1400 = vmul.f32 %v1332, %v1327
    %v1401 = vmul.f32 %v1333, %v1328
    %v1402 = vmul.f32 %v1334, %v1329
    %v1403 = vmul.f32 %v1335, %v1330
    %v1404 = vadd.f32 %v1340, %v1341
    %v1405 = vadd.f32 %v1404, %v1342
    %v1406 = vadd.f32 %v1405, %v1343
    %1407 = vadd.xlane.f32.xlu0 %v1406
    %v1408 = vpop.xlane.xlu0 %1407
    %v1409 = vadd.f32 %v1344, %v1345
    %v1410 = vadd.f32 %v1409, %v1346
    %v1411 = vadd.f32 %v1410, %v1347
    %1412 = vadd.xlane.f32.xlu0 %v1411
    %v1413 = vpop.xlane.xlu0 %1412
    %v1414 = vadd.f32 %v1348, %v1349
    %v1415 = vadd.f32 %v1414, %v1350
    %v1416 = vadd.f32 %v1415, %v1351
    %1417 = vadd.xlane.f32.xlu0 %v1416
    %v1418 = vpop.xlane.xlu0 %1417
    %v1419 = vadd.f32 %v1352, %v1353
    %v1420 = vadd.f32 %v1419, %v1354
    %v1421 = vadd.f32 %v1420, %v1355
    %1422 = vadd.xlane.f32.xlu0 %v1421
    %v1423 = vpop.xlane.xlu0 %1422
    %v1424 = vadd.f32 %v1356, %v1357
    %v1425 = vadd.f32 %v1424, %v1358
    %v1426 = vadd.f32 %v1425, %v1359
    %1427 = vadd.xlane.f32.xlu0 %v1426
    %v1428 = vpop.xlane.xlu0 %1427
    %v1429 = vadd.f32 %v1360, %v1361
    %v1430 = vadd.f32 %v1429, %v1362
    %v1431 = vadd.f32 %v1430, %v1363
    %1432 = vadd.xlane.f32.xlu0 %v1431
    %v1433 = vpop.xlane.xlu0 %1432
    %v1434 = vadd.f32 %v1364, %v1365
    %v1435 = vadd.f32 %v1434, %v1366
    %v1436 = vadd.f32 %v1435, %v1367
    %1437 = vadd.xlane.f32.xlu0 %v1436
    %v1438 = vpop.xlane.xlu0 %1437
    %v1439 = vadd.f32 %v1368, %v1369
    %v1440 = vadd.f32 %v1439, %v1370
    %v1441 = vadd.f32 %v1440, %v1371
    %1442 = vadd.xlane.f32.xlu0 %v1441
    %v1443 = vpop.xlane.xlu0 %1442
    %v1444 = vadd.f32 %v1372, %v1373
    %v1445 = vadd.f32 %v1444, %v1374
    %v1446 = vadd.f32 %v1445, %v1375
    %1447 = vadd.xlane.f32.xlu0 %v1446
    %v1448 = vpop.xlane.xlu0 %1447
    %v1449 = vadd.f32 %v1376, %v1377
    %v1450 = vadd.f32 %v1449, %v1378
    %v1451 = vadd.f32 %v1450, %v1379
    %1452 = vadd.xlane.f32.xlu0 %v1451
    %v1453 = vpop.xlane.xlu0 %1452
    %v1454 = vadd.f32 %v1380, %v1381
    %v1455 = vadd.f32 %v1454, %v1382
    %v1456 = vadd.f32 %v1455, %v1383
    %1457 = vadd.xlane.f32.xlu0 %v1456
    %v1458 = vpop.xlane.xlu0 %1457
    %v1459 = vadd.f32 %v1384, %v1385
    %v1460 = vadd.f32 %v1459, %v1386
    %v1461 = vadd.f32 %v1460, %v1387
    %1462 = vadd.xlane.f32.xlu0 %v1461
    %v1463 = vpop.xlane.xlu0 %1462
    %v1464 = vadd.f32 %v1388, %v1389
    %v1465 = vadd.f32 %v1464, %v1390
    %v1466 = vadd.f32 %v1465, %v1391
    %1467 = vadd.xlane.f32.xlu0 %v1466
    %v1468 = vpop.xlane.xlu0 %1467
    %v1469 = vadd.f32 %v1392, %v1393
    %v1470 = vadd.f32 %v1469, %v1394
    %v1471 = vadd.f32 %v1470, %v1395
    %1472 = vadd.xlane.f32.xlu0 %v1471
    %v1473 = vpop.xlane.xlu0 %1472
    %v1474 = vadd.f32 %v1396, %v1397
    %v1475 = vadd.f32 %v1474, %v1398
    %v1476 = vadd.f32 %v1475, %v1399
    %1477 = vadd.xlane.f32.xlu0 %v1476
    %v1478 = vpop.xlane.xlu0 %1477
    %v1479 = vadd.f32 %v1400, %v1401
    %v1480 = vadd.f32 %v1479, %v1402
    %v1481 = vadd.f32 %v1480, %v1403
    %1482 = vadd.xlane.f32.xlu0 %v1481
    %v1483 = vpop.xlane.xlu0 %1482
    %v1484 = vld [vmem:[#allocation2] sm:$0xff]
    %v1485 = vld [vmem:[#allocation2 + $0x8] sm:$0xff]
    %v1486 = vld [vmem:[#allocation2 + $0x10] sm:$0xff]
    %v1487 = vld [vmem:[#allocation2 + $0x18] sm:$0xff]
    %v1488 = vld [vmem:[#allocation2 + $0x20] sm:$0xff]
    %v1489 = vld [vmem:[#allocation2 + $0x28] sm:$0xff]
    %v1490 = vld [vmem:[#allocation2 + $0x30] sm:$0xff]
    %v1491 = vld [vmem:[#allocation2 + $0x38] sm:$0xff]
    %v1492 = vld [vmem:[#allocation2 + $0x40] sm:$0xff]
    %v1493 = vld [vmem:[#allocation2 + $0x48] sm:$0xff]
    %v1494 = vld [vmem:[#allocation2 + $0x50] sm:$0xff]
    %v1495 = vld [vmem:[#allocation2 + $0x58] sm:$0xff]
    %v1496 = vld [vmem:[#allocation2 + $0x60] sm:$0xff]
    %v1497 = vld [vmem:[#allocation2 + $0x68] sm:$0xff]
    %v1498 = vld [vmem:[#allocation2 + $0x70] sm:$0xff]
    %v1499 = vld [vmem:[#allocation2 + $0x78] sm:$0xff]
    %vm1500 = vcmp.gt.f32.partialorder %v615, %v1484
    %vm1501 = vcmp.gt.f32.partialorder %v620, %v1485
    %vm1502 = vcmp.gt.f32.partialorder %v625, %v1486
    %vm1503 = vcmp.gt.f32.partialorder %v630, %v1487
    %vm1504 = vcmp.gt.f32.partialorder %v635, %v1488
    %vm1505 = vcmp.gt.f32.partialorder %v640, %v1489
    %vm1506 = vcmp.gt.f32.partialorder %v645, %v1490
    %vm1507 = vcmp.gt.f32.partialorder %v650, %v1491
    %vm1508 = vcmp.gt.f32.partialorder %v655, %v1492
    %vm1509 = vcmp.gt.f32.partialorder %v660, %v1493
    %vm1510 = vcmp.gt.f32.partialorder %v665, %v1494
    %vm1511 = vcmp.gt.f32.partialorder %v670, %v1495
    %vm1512 = vcmp.gt.f32.partialorder %v675, %v1496
    %vm1513 = vcmp.gt.f32.partialorder %v680, %v1497
    %vm1514 = vcmp.gt.f32.partialorder %v685, %v1498
    %vm1515 = vcmp.gt.f32.partialorder %v690, %v1499
    %v1516 = vsel %vm1500, %v615, %v1484
    %v1517 = vsel %vm1501, %v620, %v1485
    %v1518 = vsel %vm1502, %v625, %v1486
    %v1519 = vsel %vm1503, %v630, %v1487
    %v1520 = vsel %vm1504, %v635, %v1488
    %v1521 = vsel %vm1505, %v640, %v1489
    %v1522 = vsel %vm1506, %v645, %v1490
    %v1523 = vsel %vm1507, %v650, %v1491
    %v1524 = vsel %vm1508, %v655, %v1492
    %v1525 = vsel %vm1509, %v660, %v1493
    %v1526 = vsel %vm1510, %v665, %v1494
    %v1527 = vsel %vm1511, %v670, %v1495
    %v1528 = vsel %vm1512, %v675, %v1496
    %v1529 = vsel %vm1513, %v680, %v1497
    %v1530 = vsel %vm1514, %v685, %v1498
    %v1531 = vsel %vm1515, %v690, %v1499
    %vm1532 = vcmask 7168
    %1533 = vst.msk [vmem:[#allocation2] sm:$0xff] %vm1532, %v1516
    %1534 = vst.msk [vmem:[#allocation2 + $0x8] sm:$0xff] %vm1532, %v1517
    %1535 = vst.msk [vmem:[#allocation2 + $0x10] sm:$0xff] %vm1532, %v1518
    %1536 = vst.msk [vmem:[#allocation2 + $0x18] sm:$0xff] %vm1532, %v1519
    %1537 = vst.msk [vmem:[#allocation2 + $0x20] sm:$0xff] %vm1532, %v1520
    %1538 = vst.msk [vmem:[#allocation2 + $0x28] sm:$0xff] %vm1532, %v1521
    %1539 = vst.msk [vmem:[#allocation2 + $0x30] sm:$0xff] %vm1532, %v1522
    %1540 = vst.msk [vmem:[#allocation2 + $0x38] sm:$0xff] %vm1532, %v1523
    %1541 = vst.msk [vmem:[#allocation2 + $0x40] sm:$0xff] %vm1532, %v1524
    %1542 = vst.msk [vmem:[#allocation2 + $0x48] sm:$0xff] %vm1532, %v1525
    %1543 = vst.msk [vmem:[#allocation2 + $0x50] sm:$0xff] %vm1532, %v1526
    %1544 = vst.msk [vmem:[#allocation2 + $0x58] sm:$0xff] %vm1532, %v1527
    %1545 = vst.msk [vmem:[#allocation2 + $0x60] sm:$0xff] %vm1532, %v1528
    %1546 = vst.msk [vmem:[#allocation2 + $0x68] sm:$0xff] %vm1532, %v1529
    %1547 = vst.msk [vmem:[#allocation2 + $0x70] sm:$0xff] %vm1532, %v1530
    %1548 = vst.msk [vmem:[#allocation2 + $0x78] sm:$0xff] %vm1532, %v1531
    %v1549 = vld [vmem:[#allocation3] sm:$0xff]
    %v1550 = vld [vmem:[#allocation3 + $0x8] sm:$0xff]
    %v1551 = vld [vmem:[#allocation3 + $0x10] sm:$0xff]
    %v1552 = vld [vmem:[#allocation3 + $0x18] sm:$0xff]
    %v1553 = vld [vmem:[#allocation3 + $0x20] sm:$0xff]
    %v1554 = vld [vmem:[#allocation3 + $0x28] sm:$0xff]
    %v1555 = vld [vmem:[#allocation3 + $0x30] sm:$0xff]
    %v1556 = vld [vmem:[#allocation3 + $0x38] sm:$0xff]
    %v1557 = vld [vmem:[#allocation3 + $0x40] sm:$0xff]
    %v1558 = vld [vmem:[#allocation3 + $0x48] sm:$0xff]
    %v1559 = vld [vmem:[#allocation3 + $0x50] sm:$0xff]
    %v1560 = vld [vmem:[#allocation3 + $0x58] sm:$0xff]
    %v1561 = vld [vmem:[#allocation3 + $0x60] sm:$0xff]
    %v1562 = vld [vmem:[#allocation3 + $0x68] sm:$0xff]
    %v1563 = vld [vmem:[#allocation3 + $0x70] sm:$0xff]
    %v1564 = vld [vmem:[#allocation3 + $0x78] sm:$0xff]
    %v1565 = vsel %vm1500, %v1408, %v1549
    %v1566 = vsel %vm1501, %v1413, %v1550
    %v1567 = vsel %vm1502, %v1418, %v1551
    %v1568 = vsel %vm1503, %v1423, %v1552
    %v1569 = vsel %vm1504, %v1428, %v1553
    %v1570 = vsel %vm1505, %v1433, %v1554
    %v1571 = vsel %vm1506, %v1438, %v1555
    %v1572 = vsel %vm1507, %v1443, %v1556
    %v1573 = vsel %vm1508, %v1448, %v1557
    %v1574 = vsel %vm1509, %v1453, %v1558
    %v1575 = vsel %vm1510, %v1458, %v1559
    %v1576 = vsel %vm1511, %v1463, %v1560
    %v1577 = vsel %vm1512, %v1468, %v1561
    %v1578 = vsel %vm1513, %v1473, %v1562
    %v1579 = vsel %vm1514, %v1478, %v1563
    %v1580 = vsel %vm1515, %v1483, %v1564
    %1581 = vst.msk [vmem:[#allocation3] sm:$0xff] %vm1532, %v1565
    %1582 = vst.msk [vmem:[#allocation3 + $0x8] sm:$0xff] %vm1532, %v1566
    %1583 = vst.msk [vmem:[#allocation3 + $0x10] sm:$0xff] %vm1532, %v1567
    %1584 = vst.msk [vmem:[#allocation3 + $0x18] sm:$0xff] %vm1532, %v1568
    %1585 = vst.msk [vmem:[#allocation3 + $0x20] sm:$0xff] %vm1532, %v1569
    %1586 = vst.msk [vmem:[#allocation3 + $0x28] sm:$0xff] %vm1532, %v1570
    %1587 = vst.msk [vmem:[#allocation3 + $0x30] sm:$0xff] %vm1532, %v1571
    %1588 = vst.msk [vmem:[#allocation3 + $0x38] sm:$0xff] %vm1532, %v1572
    %1589 = vst.msk [vmem:[#allocation3 + $0x40] sm:$0xff] %vm1532, %v1573
    %1590 = vst.msk [vmem:[#allocation3 + $0x48] sm:$0xff] %vm1532, %v1574
    %1591 = vst.msk [vmem:[#allocation3 + $0x50] sm:$0xff] %vm1532, %v1575
    %1592 = vst.msk [vmem:[#allocation3 + $0x58] sm:$0xff] %vm1532, %v1576
    %1593 = vst.msk [vmem:[#allocation3 + $0x60] sm:$0xff] %vm1532, %v1577
    %1594 = vst.msk [vmem:[#allocation3 + $0x68] sm:$0xff] %vm1532, %v1578
    %1595 = vst.msk [vmem:[#allocation3 + $0x70] sm:$0xff] %vm1532, %v1579
    %1596 = vst.msk [vmem:[#allocation3 + $0x78] sm:$0xff] %vm1532, %v1580
    // Predicated region
    $region38: #{tpu_custom_call.1} parent=1 // pred_check
      %p1597 = pneg %p80
    $region39: #{tpu_custom_call.1} parent=1 // pred_check_branch
      %1599 = sbr.rel (%p1597) target = $region41
    $region40: #{tpu_custom_call.1} parent=1 // pred_region
      %v1600 = vmul.f32 %v117, %v117
      %v1601 = vmul.f32 %v118, %v118
      %v1602 = vmul.f32 %v119, %v119
      %v1603 = vmul.f32 %v120, %v120
      %v1604 = vmul.f32 %v121, %v121
      %v1605 = vmul.f32 %v122, %v122
      %v1606 = vmul.f32 %v123, %v123
      %v1607 = vmul.f32 %v124, %v124
      %v1608 = vmul.f32 %v125, %v125
      %v1609 = vmul.f32 %v126, %v126
      %v1610 = vmul.f32 %v127, %v127
      %v1611 = vmul.f32 %v128, %v128
      %v1612 = vmul.f32 %v129, %v129
      %v1613 = vmul.f32 %v130, %v130
      %v1614 = vmul.f32 %v131, %v131
      %v1615 = vmul.f32 %v132, %v132
      %1616 = vadd.xlane.f32.xlu0 %v1600
      %v1617 = vpop.xlane.xlu0 %1616
      %1618 = vadd.xlane.f32.xlu0 %v1601
      %v1619 = vpop.xlane.xlu0 %1618
      %1620 = vadd.xlane.f32.xlu0 %v1602
      %v1621 = vpop.xlane.xlu0 %1620
      %1622 = vadd.xlane.f32.xlu0 %v1603
      %v1623 = vpop.xlane.xlu0 %1622
      %1624 = vadd.xlane.f32.xlu0 %v1604
      %v1625 = vpop.xlane.xlu0 %1624
      %1626 = vadd.xlane.f32.xlu0 %v1605
      %v1627 = vpop.xlane.xlu0 %1626
      %1628 = vadd.xlane.f32.xlu0 %v1606
      %v1629 = vpop.xlane.xlu0 %1628
      %1630 = vadd.xlane.f32.xlu0 %v1607
      %v1631 = vpop.xlane.xlu0 %1630
      %1632 = vadd.xlane.f32.xlu0 %v1608
      %v1633 = vpop.xlane.xlu0 %1632
      %1634 = vadd.xlane.f32.xlu0 %v1609
      %v1635 = vpop.xlane.xlu0 %1634
      %1636 = vadd.xlane.f32.xlu0 %v1610
      %v1637 = vpop.xlane.xlu0 %1636
      %1638 = vadd.xlane.f32.xlu0 %v1611
      %v1639 = vpop.xlane.xlu0 %1638
      %1640 = vadd.xlane.f32.xlu0 %v1612
      %v1641 = vpop.xlane.xlu0 %1640
      %1642 = vadd.xlane.f32.xlu0 %v1613
      %v1643 = vpop.xlane.xlu0 %1642
      %1644 = vadd.xlane.f32.xlu0 %v1614
      %v1645 = vpop.xlane.xlu0 %1644
      %1646 = vadd.xlane.f32.xlu0 %v1615
      %v1647 = vpop.xlane.xlu0 %1646
      %v1648 = vld [vmem:[#allocation2] sm:$0xff]
      %v1649 = vld [vmem:[#allocation2 + $0x8] sm:$0xff]
      %v1650 = vld [vmem:[#allocation2 + $0x10] sm:$0xff]
      %v1651 = vld [vmem:[#allocation2 + $0x18] sm:$0xff]
      %v1652 = vld [vmem:[#allocation2 + $0x20] sm:$0xff]
      %v1653 = vld [vmem:[#allocation2 + $0x28] sm:$0xff]
      %v1654 = vld [vmem:[#allocation2 + $0x30] sm:$0xff]
      %v1655 = vld [vmem:[#allocation2 + $0x38] sm:$0xff]
      %v1656 = vld [vmem:[#allocation2 + $0x40] sm:$0xff]
      %v1657 = vld [vmem:[#allocation2 + $0x48] sm:$0xff]
      %v1658 = vld [vmem:[#allocation2 + $0x50] sm:$0xff]
      %v1659 = vld [vmem:[#allocation2 + $0x58] sm:$0xff]
      %v1660 = vld [vmem:[#allocation2 + $0x60] sm:$0xff]
      %v1661 = vld [vmem:[#allocation2 + $0x68] sm:$0xff]
      %v1662 = vld [vmem:[#allocation2 + $0x70] sm:$0xff]
      %v1663 = vld [vmem:[#allocation2 + $0x78] sm:$0xff]
      %v1664 = vld [vmem:[#allocation3] sm:$0xff]
      %v1665 = vld [vmem:[#allocation3 + $0x8] sm:$0xff]
      %v1666 = vld [vmem:[#allocation3 + $0x10] sm:$0xff]
      %v1667 = vld [vmem:[#allocation3 + $0x18] sm:$0xff]
      %v1668 = vld [vmem:[#allocation3 + $0x20] sm:$0xff]
      %v1669 = vld [vmem:[#allocation3 + $0x28] sm:$0xff]
      %v1670 = vld [vmem:[#allocation3 + $0x30] sm:$0xff]
      %v1671 = vld [vmem:[#allocation3 + $0x38] sm:$0xff]
      %v1672 = vld [vmem:[#allocation3 + $0x40] sm:$0xff]
      %v1673 = vld [vmem:[#allocation3 + $0x48] sm:$0xff]
      %v1674 = vld [vmem:[#allocation3 + $0x50] sm:$0xff]
      %v1675 = vld [vmem:[#allocation3 + $0x58] sm:$0xff]
      %v1676 = vld [vmem:[#allocation3 + $0x60] sm:$0xff]
      %v1677 = vld [vmem:[#allocation3 + $0x68] sm:$0xff]
      %v1678 = vld [vmem:[#allocation3 + $0x70] sm:$0xff]
      %v1679 = vld [vmem:[#allocation3 + $0x78] sm:$0xff]
      %v1680 = vmul.f32 %v1648, %v1664
      %v1681 = vmul.f32 %v1649, %v1665
      %v1682 = vmul.f32 %v1650, %v1666
      %v1683 = vmul.f32 %v1651, %v1667
      %v1684 = vmul.f32 %v1652, %v1668
      %v1685 = vmul.f32 %v1653, %v1669
      %v1686 = vmul.f32 %v1654, %v1670
      %v1687 = vmul.f32 %v1655, %v1671
      %v1688 = vmul.f32 %v1656, %v1672
      %v1689 = vmul.f32 %v1657, %v1673
      %v1690 = vmul.f32 %v1658, %v1674
      %v1691 = vmul.f32 %v1659, %v1675
      %v1692 = vmul.f32 %v1660, %v1676
      %v1693 = vmul.f32 %v1661, %v1677
      %v1694 = vmul.f32 %v1662, %v1678
      %v1695 = vmul.f32 %v1663, %v1679
      %v1696 = vmul.f32 %v1680, 2.0
      %v1697 = vmul.f32 %v1681, 2.0
      %v1698 = vmul.f32 %v1682, 2.0
      %v1699 = vmul.f32 %v1683, 2.0
      %v1700 = vmul.f32 %v1684, 2.0
      %v1701 = vmul.f32 %v1685, 2.0
      %v1702 = vmul.f32 %v1686, 2.0
      %v1703 = vmul.f32 %v1687, 2.0
      %v1704 = vmul.f32 %v1688, 2.0
      %v1705 = vmul.f32 %v1689, 2.0
      %v1706 = vmul.f32 %v1690, 2.0
      %v1707 = vmul.f32 %v1691, 2.0
      %v1708 = vmul.f32 %v1692, 2.0
      %v1709 = vmul.f32 %v1693, 2.0
      %v1710 = vmul.f32 %v1694, 2.0
      %v1711 = vmul.f32 %v1695, 2.0
      %v1712 = vsub.f32 %v1617, %v1696
      %v1713 = vsub.f32 %v1619, %v1697
      %v1714 = vsub.f32 %v1621, %v1698
      %v1715 = vsub.f32 %v1623, %v1699
      %v1716 = vsub.f32 %v1625, %v1700
      %v1717 = vsub.f32 %v1627, %v1701
      %v1718 = vsub.f32 %v1629, %v1702
      %v1719 = vsub.f32 %v1631, %v1703
      %v1720 = vsub.f32 %v1633, %v1704
      %v1721 = vsub.f32 %v1635, %v1705
      %v1722 = vsub.f32 %v1637, %v1706
      %v1723 = vsub.f32 %v1639, %v1707
      %v1724 = vsub.f32 %v1641, %v1708
      %v1725 = vsub.f32 %v1643, %v1709
      %v1726 = vsub.f32 %v1645, %v1710
      %v1727 = vsub.f32 %v1647, %v1711
      %v1728 = vmul.f32 %v1664, %v1664
      %v1729 = vmul.f32 %v1665, %v1665
      %v1730 = vmul.f32 %v1666, %v1666
      %v1731 = vmul.f32 %v1667, %v1667
      %v1732 = vmul.f32 %v1668, %v1668
      %v1733 = vmul.f32 %v1669, %v1669
      %v1734 = vmul.f32 %v1670, %v1670
      %v1735 = vmul.f32 %v1671, %v1671
      %v1736 = vmul.f32 %v1672, %v1672
      %v1737 = vmul.f32 %v1673, %v1673
      %v1738 = vmul.f32 %v1674, %v1674
      %v1739 = vmul.f32 %v1675, %v1675
      %v1740 = vmul.f32 %v1676, %v1676
      %v1741 = vmul.f32 %v1677, %v1677
      %v1742 = vmul.f32 %v1678, %v1678
      %v1743 = vmul.f32 %v1679, %v1679
      %v1744 = vadd.f32 %v1712, %v1728
      %v1745 = vadd.f32 %v1713, %v1729
      %v1746 = vadd.f32 %v1714, %v1730
      %v1747 = vadd.f32 %v1715, %v1731
      %v1748 = vadd.f32 %v1716, %v1732
      %v1749 = vadd.f32 %v1717, %v1733
      %v1750 = vadd.f32 %v1718, %v1734
      %v1751 = vadd.f32 %v1719, %v1735
      %v1752 = vadd.f32 %v1720, %v1736
      %v1753 = vadd.f32 %v1721, %v1737
      %v1754 = vadd.f32 %v1722, %v1738
      %v1755 = vadd.f32 %v1723, %v1739
      %v1756 = vadd.f32 %v1724, %v1740
      %v1757 = vadd.f32 %v1725, %v1741
      %v1758 = vadd.f32 %v1726, %v1742
      %v1759 = vadd.f32 %v1727, %v1743
      %v1760 = vrcp.pop 36.0
      %v1761 = vmul.f32 36.0, %v1760
      %v1762 = vsub.f32 1.0, %v1761
      %v1763 = vmul.f32 %v1760, %v1762
      %v1764 = vadd.f32 %v1760, %v1763
      %vm1765 = vweird.f32 %v1760
      %v1766 = vsel %vm1765, %v1760, %v1764
      %v1767 = vmul.f32 %v1744, %v1766
      %v1768 = vmul.f32 %v1745, %v1766
      %v1769 = vmul.f32 %v1746, %v1766
      %v1770 = vmul.f32 %v1747, %v1766
      %v1771 = vmul.f32 %v1748, %v1766
      %v1772 = vmul.f32 %v1749, %v1766
      %v1773 = vmul.f32 %v1750, %v1766
      %v1774 = vmul.f32 %v1751, %v1766
      %v1775 = vmul.f32 %v1752, %v1766
      %v1776 = vmul.f32 %v1753, %v1766
      %v1777 = vmul.f32 %v1754, %v1766
      %v1778 = vmul.f32 %v1755, %v1766
      %v1779 = vmul.f32 %v1756, %v1766
      %v1780 = vmul.f32 %v1757, %v1766
      %v1781 = vmul.f32 %v1758, %v1766
      %v1782 = vmul.f32 %v1759, %v1766
      %v1783 = vrsqrt.pop %v1617
      %v1784 = vmul.f32 %v1783, %v1617
      %v1785 = vmul.f32 %v1784, %v1783
      %v1786 = vmul.f32 0.5, %v1785
      %v1787 = vsub.f32 1.5, %v1786
      %v1788 = vmul.f32 %v1783, %v1787
      %v1789 = vmul.f32 %v1617, %v1788
      %vm1790 = vcmp.eq.f32.partialorder %v1617, inf
      %v1791 = vsel %vm1790, %v1617, %v1789
      %vm1792 = vcmp.eq.f32.partialorder %v1617, 0.0
      %v1793 = vand.u32 %v1617, 2147483648
      %v1794 = vsel %vm1792, %v1793, %v1791
      %v1795 = vrsqrt.pop %v1619
      %v1796 = vmul.f32 %v1795, %v1619
      %v1797 = vmul.f32 %v1796, %v1795
      %v1798 = vmul.f32 0.5, %v1797
      %v1799 = vsub.f32 1.5, %v1798
      %v1800 = vmul.f32 %v1795, %v1799
      %v1801 = vmul.f32 %v1619, %v1800
      %vm1802 = vcmp.eq.f32.partialorder %v1619, inf
      %v1803 = vsel %vm1802, %v1619, %v1801
      %vm1804 = vcmp.eq.f32.partialorder %v1619, 0.0
      %v1805 = vand.u32 %v1619, 2147483648
      %v1806 = vsel %vm1804, %v1805, %v1803
      %v1807 = vrsqrt.pop %v1621
      %v1808 = vmul.f32 %v1807, %v1621
      %v1809 = vmul.f32 %v1808, %v1807
      %v1810 = vmul.f32 0.5, %v1809
      %v1811 = vsub.f32 1.5, %v1810
      %v1812 = vmul.f32 %v1807, %v1811
      %v1813 = vmul.f32 %v1621, %v1812
      %vm1814 = vcmp.eq.f32.partialorder %v1621, inf
      %v1815 = vsel %vm1814, %v1621, %v1813
      %vm1816 = vcmp.eq.f32.partialorder %v1621, 0.0
      %v1817 = vand.u32 %v1621, 2147483648
      %v1818 = vsel %vm1816, %v1817, %v1815
      %v1819 = vrsqrt.pop %v1623
      %v1820 = vmul.f32 %v1819, %v1623
      %v1821 = vmul.f32 %v1820, %v1819
      %v1822 = vmul.f32 0.5, %v1821
      %v1823 = vsub.f32 1.5, %v1822
      %v1824 = vmul.f32 %v1819, %v1823
      %v1825 = vmul.f32 %v1623, %v1824
      %vm1826 = vcmp.eq.f32.partialorder %v1623, inf
      %v1827 = vsel %vm1826, %v1623, %v1825
      %vm1828 = vcmp.eq.f32.partialorder %v1623, 0.0
      %v1829 = vand.u32 %v1623, 2147483648
      %v1830 = vsel %vm1828, %v1829, %v1827
      %v1831 = vrsqrt.pop %v1625
      %v1832 = vmul.f32 %v1831, %v1625
      %v1833 = vmul.f32 %v1832, %v1831
      %v1834 = vmul.f32 0.5, %v1833
      %v1835 = vsub.f32 1.5, %v1834
      %v1836 = vmul.f32 %v1831, %v1835
      %v1837 = vmul.f32 %v1625, %v1836
      %vm1838 = vcmp.eq.f32.partialorder %v1625, inf
      %v1839 = vsel %vm1838, %v1625, %v1837
      %vm1840 = vcmp.eq.f32.partialorder %v1625, 0.0
      %v1841 = vand.u32 %v1625, 2147483648
      %v1842 = vsel %vm1840, %v1841, %v1839
      %v1843 = vrsqrt.pop %v1627
      %v1844 = vmul.f32 %v1843, %v1627
      %v1845 = vmul.f32 %v1844, %v1843
      %v1846 = vmul.f32 0.5, %v1845
      %v1847 = vsub.f32 1.5, %v1846
      %v1848 = vmul.f32 %v1843, %v1847
      %v1849 = vmul.f32 %v1627, %v1848
      %vm1850 = vcmp.eq.f32.partialorder %v1627, inf
      %v1851 = vsel %vm1850, %v1627, %v1849
      %vm1852 = vcmp.eq.f32.partialorder %v1627, 0.0
      %v1853 = vand.u32 %v1627, 2147483648
      %v1854 = vsel %vm1852, %v1853, %v1851
      %v1855 = vrsqrt.pop %v1629
      %v1856 = vmul.f32 %v1855, %v1629
      %v1857 = vmul.f32 %v1856, %v1855
      %v1858 = vmul.f32 0.5, %v1857
      %v1859 = vsub.f32 1.5, %v1858
      %v1860 = vmul.f32 %v1855, %v1859
      %v1861 = vmul.f32 %v1629, %v1860
      %vm1862 = vcmp.eq.f32.partialorder %v1629, inf
      %v1863 = vsel %vm1862, %v1629, %v1861
      %vm1864 = vcmp.eq.f32.partialorder %v1629, 0.0
      %v1865 = vand.u32 %v1629, 2147483648
      %v1866 = vsel %vm1864, %v1865, %v1863
      %v1867 = vrsqrt.pop %v1631
      %v1868 = vmul.f32 %v1867, %v1631
      %v1869 = vmul.f32 %v1868, %v1867
      %v1870 = vmul.f32 0.5, %v1869
      %v1871 = vsub.f32 1.5, %v1870
      %v1872 = vmul.f32 %v1867, %v1871
      %v1873 = vmul.f32 %v1631, %v1872
      %vm1874 = vcmp.eq.f32.partialorder %v1631, inf
      %v1875 = vsel %vm1874, %v1631, %v1873
      %vm1876 = vcmp.eq.f32.partialorder %v1631, 0.0
      %v1877 = vand.u32 %v1631, 2147483648
      %v1878 = vsel %vm1876, %v1877, %v1875
      %v1879 = vrsqrt.pop %v1633
      %v1880 = vmul.f32 %v1879, %v1633
      %v1881 = vmul.f32 %v1880, %v1879
      %v1882 = vmul.f32 0.5, %v1881
      %v1883 = vsub.f32 1.5, %v1882
      %v1884 = vmul.f32 %v1879, %v1883
      %v1885 = vmul.f32 %v1633, %v1884
      %vm1886 = vcmp.eq.f32.partialorder %v1633, inf
      %v1887 = vsel %vm1886, %v1633, %v1885
      %vm1888 = vcmp.eq.f32.partialorder %v1633, 0.0
      %v1889 = vand.u32 %v1633, 2147483648
      %v1890 = vsel %vm1888, %v1889, %v1887
      %v1891 = vrsqrt.pop %v1635
      %v1892 = vmul.f32 %v1891, %v1635
      %v1893 = vmul.f32 %v1892, %v1891
      %v1894 = vmul.f32 0.5, %v1893
      %v1895 = vsub.f32 1.5, %v1894
      %v1896 = vmul.f32 %v1891, %v1895
      %v1897 = vmul.f32 %v1635, %v1896
      %vm1898 = vcmp.eq.f32.partialorder %v1635, inf
      %v1899 = vsel %vm1898, %v1635, %v1897
      %vm1900 = vcmp.eq.f32.partialorder %v1635, 0.0
      %v1901 = vand.u32 %v1635, 2147483648
      %v1902 = vsel %vm1900, %v1901, %v1899
      %v1903 = vrsqrt.pop %v1637
      %v1904 = vmul.f32 %v1903, %v1637
      %v1905 = vmul.f32 %v1904, %v1903
      %v1906 = vmul.f32 0.5, %v1905
      %v1907 = vsub.f32 1.5, %v1906
      %v1908 = vmul.f32 %v1903, %v1907
      %v1909 = vmul.f32 %v1637, %v1908
      %vm1910 = vcmp.eq.f32.partialorder %v1637, inf
      %v1911 = vsel %vm1910, %v1637, %v1909
      %vm1912 = vcmp.eq.f32.partialorder %v1637, 0.0
      %v1913 = vand.u32 %v1637, 2147483648
      %v1914 = vsel %vm1912, %v1913, %v1911
      %v1915 = vrsqrt.pop %v1639
      %v1916 = vmul.f32 %v1915, %v1639
      %v1917 = vmul.f32 %v1916, %v1915
      %v1918 = vmul.f32 0.5, %v1917
      %v1919 = vsub.f32 1.5, %v1918
      %v1920 = vmul.f32 %v1915, %v1919
      %v1921 = vmul.f32 %v1639, %v1920
      %vm1922 = vcmp.eq.f32.partialorder %v1639, inf
      %v1923 = vsel %vm1922, %v1639, %v1921
      %vm1924 = vcmp.eq.f32.partialorder %v1639, 0.0
      %v1925 = vand.u32 %v1639, 2147483648
      %v1926 = vsel %vm1924, %v1925, %v1923
      %v1927 = vrsqrt.pop %v1641
      %v1928 = vmul.f32 %v1927, %v1641
      %v1929 = vmul.f32 %v1928, %v1927
      %v1930 = vmul.f32 0.5, %v1929
      %v1931 = vsub.f32 1.5, %v1930
      %v1932 = vmul.f32 %v1927, %v1931
      %v1933 = vmul.f32 %v1641, %v1932
      %vm1934 = vcmp.eq.f32.partialorder %v1641, inf
      %v1935 = vsel %vm1934, %v1641, %v1933
      %vm1936 = vcmp.eq.f32.partialorder %v1641, 0.0
      %v1937 = vand.u32 %v1641, 2147483648
      %v1938 = vsel %vm1936, %v1937, %v1935
      %v1939 = vrsqrt.pop %v1643
      %v1940 = vmul.f32 %v1939, %v1643
      %v1941 = vmul.f32 %v1940, %v1939
      %v1942 = vmul.f32 0.5, %v1941
      %v1943 = vsub.f32 1.5, %v1942
      %v1944 = vmul.f32 %v1939, %v1943
      %v1945 = vmul.f32 %v1643, %v1944
      %vm1946 = vcmp.eq.f32.partialorder %v1643, inf
      %v1947 = vsel %vm1946, %v1643, %v1945
      %vm1948 = vcmp.eq.f32.partialorder %v1643, 0.0
      %v1949 = vand.u32 %v1643, 2147483648
      %v1950 = vsel %vm1948, %v1949, %v1947
      %v1951 = vrsqrt.pop %v1645
      %v1952 = vmul.f32 %v1951, %v1645
      %v1953 = vmul.f32 %v1952, %v1951
      %v1954 = vmul.f32 0.5, %v1953
      %v1955 = vsub.f32 1.5, %v1954
      %v1956 = vmul.f32 %v1951, %v1955
      %v1957 = vmul.f32 %v1645, %v1956
      %vm1958 = vcmp.eq.f32.partialorder %v1645, inf
      %v1959 = vsel %vm1958, %v1645, %v1957
      %vm1960 = vcmp.eq.f32.partialorder %v1645, 0.0
      %v1961 = vand.u32 %v1645, 2147483648
      %v1962 = vsel %vm1960, %v1961, %v1959
      %v1963 = vrsqrt.pop %v1647
      %v1964 = vmul.f32 %v1963, %v1647
      %v1965 = vmul.f32 %v1964, %v1963
      %v1966 = vmul.f32 0.5, %v1965
      %v1967 = vsub.f32 1.5, %v1966
      %v1968 = vmul.f32 %v1963, %v1967
      %v1969 = vmul.f32 %v1647, %v1968
      %vm1970 = vcmp.eq.f32.partialorder %v1647, inf
      %v1971 = vsel %vm1970, %v1647, %v1969
      %vm1972 = vcmp.eq.f32.partialorder %v1647, 0.0
      %v1973 = vand.u32 %v1647, 2147483648
      %v1974 = vsel %vm1972, %v1973, %v1971
      %v1975 = vrcp.pop %v1794
      %v1976 = vmul.f32 %v1794, %v1975
      %v1977 = vsub.f32 1.0, %v1976
      %v1978 = vmul.f32 %v1975, %v1977
      %v1979 = vadd.f32 %v1975, %v1978
      %vm1980 = vweird.f32 %v1794
      %vm1981 = vweird.f32 %v1975
      %vm1982 = vmor %vm1980, %vm1981
      %v1983 = vsel %vm1982, %v1975, %v1979
      %v1984 = vand.u32 2147483647, %v1794
      %vm1985 = vcmp.eq.f32.partialorder %v1984, 8.507059e+37
      %v1986 = vand.u32 %v1794, 2147483648
      %v1987 = vor.u32 1.1754944e-38, %v1986
      %v1988 = vsel %vm1985, %v1987, %v1983
      %v1989 = vmul.f32 %v1648, %v1988
      %v1990 = vrcp.pop %v1806
      %v1991 = vmul.f32 %v1806, %v1990
      %v1992 = vsub.f32 1.0, %v1991
      %v1993 = vmul.f32 %v1990, %v1992
      %v1994 = vadd.f32 %v1990, %v1993
      %vm1995 = vweird.f32 %v1806
      %vm1996 = vweird.f32 %v1990
      %vm1997 = vmor %vm1995, %vm1996
      %v1998 = vsel %vm1997, %v1990, %v1994
      %v1999 = vand.u32 2147483647, %v1806
      %vm2000 = vcmp.eq.f32.partialorder %v1999, 8.507059e+37
      %v2001 = vand.u32 %v1806, 2147483648
      %v2002 = vor.u32 1.1754944e-38, %v2001
      %v2003 = vsel %vm2000, %v2002, %v1998
      %v2004 = vmul.f32 %v1649, %v2003
      %v2005 = vrcp.pop %v1818
      %v2006 = vmul.f32 %v1818, %v2005
      %v2007 = vsub.f32 1.0, %v2006
      %v2008 = vmul.f32 %v2005, %v2007
      %v2009 = vadd.f32 %v2005, %v2008
      %vm2010 = vweird.f32 %v1818
      %vm2011 = vweird.f32 %v2005
      %vm2012 = vmor %vm2010, %vm2011
      %v2013 = vsel %vm2012, %v2005, %v2009
      %v2014 = vand.u32 2147483647, %v1818
      %vm2015 = vcmp.eq.f32.partialorder %v2014, 8.507059e+37
      %v2016 = vand.u32 %v1818, 2147483648
      %v2017 = vor.u32 1.1754944e-38, %v2016
      %v2018 = vsel %vm2015, %v2017, %v2013
      %v2019 = vmul.f32 %v1650, %v2018
      %v2020 = vrcp.pop %v1830
      %v2021 = vmul.f32 %v1830, %v2020
      %v2022 = vsub.f32 1.0, %v2021
      %v2023 = vmul.f32 %v2020, %v2022
      %v2024 = vadd.f32 %v2020, %v2023
      %vm2025 = vweird.f32 %v1830
      %vm2026 = vweird.f32 %v2020
      %vm2027 = vmor %vm2025, %vm2026
      %v2028 = vsel %vm2027, %v2020, %v2024
      %v2029 = vand.u32 2147483647, %v1830
      %vm2030 = vcmp.eq.f32.partialorder %v2029, 8.507059e+37
      %v2031 = vand.u32 %v1830, 2147483648
      %v2032 = vor.u32 1.1754944e-38, %v2031
      %v2033 = vsel %vm2030, %v2032, %v2028
      %v2034 = vmul.f32 %v1651, %v2033
      %v2035 = vrcp.pop %v1842
      %v2036 = vmul.f32 %v1842, %v2035
      %v2037 = vsub.f32 1.0, %v2036
      %v2038 = vmul.f32 %v2035, %v2037
      %v2039 = vadd.f32 %v2035, %v2038
      %vm2040 = vweird.f32 %v1842
      %vm2041 = vweird.f32 %v2035
      %vm2042 = vmor %vm2040, %vm2041
      %v2043 = vsel %vm2042, %v2035, %v2039
      %v2044 = vand.u32 2147483647, %v1842
      %vm2045 = vcmp.eq.f32.partialorder %v2044, 8.507059e+37
      %v2046 = vand.u32 %v1842, 2147483648
      %v2047 = vor.u32 1.1754944e-38, %v2046
      %v2048 = vsel %vm2045, %v2047, %v2043
      %v2049 = vmul.f32 %v1652, %v2048
      %v2050 = vrcp.pop %v1854
      %v2051 = vmul.f32 %v1854, %v2050
      %v2052 = vsub.f32 1.0, %v2051
      %v2053 = vmul.f32 %v2050, %v2052
      %v2054 = vadd.f32 %v2050, %v2053
      %vm2055 = vweird.f32 %v1854
      %vm2056 = vweird.f32 %v2050
      %vm2057 = vmor %vm2055, %vm2056
      %v2058 = vsel %vm2057, %v2050, %v2054
      %v2059 = vand.u32 2147483647, %v1854
      %vm2060 = vcmp.eq.f32.partialorder %v2059, 8.507059e+37
      %v2061 = vand.u32 %v1854, 2147483648
      %v2062 = vor.u32 1.1754944e-38, %v2061
      %v2063 = vsel %vm2060, %v2062, %v2058
      %v2064 = vmul.f32 %v1653, %v2063
      %v2065 = vrcp.pop %v1866
      %v2066 = vmul.f32 %v1866, %v2065
      %v2067 = vsub.f32 1.0, %v2066
      %v2068 = vmul.f32 %v2065, %v2067
      %v2069 = vadd.f32 %v2065, %v2068
      %vm2070 = vweird.f32 %v1866
      %vm2071 = vweird.f32 %v2065
      %vm2072 = vmor %vm2070, %vm2071
      %v2073 = vsel %vm2072, %v2065, %v2069
      %v2074 = vand.u32 2147483647, %v1866
      %vm2075 = vcmp.eq.f32.partialorder %v2074, 8.507059e+37
      %v2076 = vand.u32 %v1866, 2147483648
      %v2077 = vor.u32 1.1754944e-38, %v2076
      %v2078 = vsel %vm2075, %v2077, %v2073
      %v2079 = vmul.f32 %v1654, %v2078
      %v2080 = vrcp.pop %v1878
      %v2081 = vmul.f32 %v1878, %v2080
      %v2082 = vsub.f32 1.0, %v2081
      %v2083 = vmul.f32 %v2080, %v2082
      %v2084 = vadd.f32 %v2080, %v2083
      %vm2085 = vweird.f32 %v1878
      %vm2086 = vweird.f32 %v2080
      %vm2087 = vmor %vm2085, %vm2086
      %v2088 = vsel %vm2087, %v2080, %v2084
      %v2089 = vand.u32 2147483647, %v1878
      %vm2090 = vcmp.eq.f32.partialorder %v2089, 8.507059e+37
      %v2091 = vand.u32 %v1878, 2147483648
      %v2092 = vor.u32 1.1754944e-38, %v2091
      %v2093 = vsel %vm2090, %v2092, %v2088
      %v2094 = vmul.f32 %v1655, %v2093
      %v2095 = vrcp.pop %v1890
      %v2096 = vmul.f32 %v1890, %v2095
      %v2097 = vsub.f32 1.0, %v2096
      %v2098 = vmul.f32 %v2095, %v2097
      %v2099 = vadd.f32 %v2095, %v2098
      %vm2100 = vweird.f32 %v1890
      %vm2101 = vweird.f32 %v2095
      %vm2102 = vmor %vm2100, %vm2101
      %v2103 = vsel %vm2102, %v2095, %v2099
      %v2104 = vand.u32 2147483647, %v1890
      %vm2105 = vcmp.eq.f32.partialorder %v2104, 8.507059e+37
      %v2106 = vand.u32 %v1890, 2147483648
      %v2107 = vor.u32 1.1754944e-38, %v2106
      %v2108 = vsel %vm2105, %v2107, %v2103
      %v2109 = vmul.f32 %v1656, %v2108
      %v2110 = vrcp.pop %v1902
      %v2111 = vmul.f32 %v1902, %v2110
      %v2112 = vsub.f32 1.0, %v2111
      %v2113 = vmul.f32 %v2110, %v2112
      %v2114 = vadd.f32 %v2110, %v2113
      %vm2115 = vweird.f32 %v1902
      %vm2116 = vweird.f32 %v2110
      %vm2117 = vmor %vm2115, %vm2116
      %v2118 = vsel %vm2117, %v2110, %v2114
      %v2119 = vand.u32 2147483647, %v1902
      %vm2120 = vcmp.eq.f32.partialorder %v2119, 8.507059e+37
      %v2121 = vand.u32 %v1902, 2147483648
      %v2122 = vor.u32 1.1754944e-38, %v2121
      %v2123 = vsel %vm2120, %v2122, %v2118
      %v2124 = vmul.f32 %v1657, %v2123
      %v2125 = vrcp.pop %v1914
      %v2126 = vmul.f32 %v1914, %v2125
      %v2127 = vsub.f32 1.0, %v2126
      %v2128 = vmul.f32 %v2125, %v2127
      %v2129 = vadd.f32 %v2125, %v2128
      %vm2130 = vweird.f32 %v1914
      %vm2131 = vweird.f32 %v2125
      %vm2132 = vmor %vm2130, %vm2131
      %v2133 = vsel %vm2132, %v2125, %v2129
      %v2134 = vand.u32 2147483647, %v1914
      %vm2135 = vcmp.eq.f32.partialorder %v2134, 8.507059e+37
      %v2136 = vand.u32 %v1914, 2147483648
      %v2137 = vor.u32 1.1754944e-38, %v2136
      %v2138 = vsel %vm2135, %v2137, %v2133
      %v2139 = vmul.f32 %v1658, %v2138
      %v2140 = vrcp.pop %v1926
      %v2141 = vmul.f32 %v1926, %v2140
      %v2142 = vsub.f32 1.0, %v2141
      %v2143 = vmul.f32 %v2140, %v2142
      %v2144 = vadd.f32 %v2140, %v2143
      %vm2145 = vweird.f32 %v1926
      %vm2146 = vweird.f32 %v2140
      %vm2147 = vmor %vm2145, %vm2146
      %v2148 = vsel %vm2147, %v2140, %v2144
      %v2149 = vand.u32 2147483647, %v1926
      %vm2150 = vcmp.eq.f32.partialorder %v2149, 8.507059e+37
      %v2151 = vand.u32 %v1926, 2147483648
      %v2152 = vor.u32 1.1754944e-38, %v2151
      %v2153 = vsel %vm2150, %v2152, %v2148
      %v2154 = vmul.f32 %v1659, %v2153
      %v2155 = vrcp.pop %v1938
      %v2156 = vmul.f32 %v1938, %v2155
      %v2157 = vsub.f32 1.0, %v2156
      %v2158 = vmul.f32 %v2155, %v2157
      %v2159 = vadd.f32 %v2155, %v2158
      %vm2160 = vweird.f32 %v1938
      %vm2161 = vweird.f32 %v2155
      %vm2162 = vmor %vm2160, %vm2161
      %v2163 = vsel %vm2162, %v2155, %v2159
      %v2164 = vand.u32 2147483647, %v1938
      %vm2165 = vcmp.eq.f32.partialorder %v2164, 8.507059e+37
      %v2166 = vand.u32 %v1938, 2147483648
      %v2167 = vor.u32 1.1754944e-38, %v2166
      %v2168 = vsel %vm2165, %v2167, %v2163
      %v2169 = vmul.f32 %v1660, %v2168
      %v2170 = vrcp.pop %v1950
      %v2171 = vmul.f32 %v1950, %v2170
      %v2172 = vsub.f32 1.0, %v2171
      %v2173 = vmul.f32 %v2170, %v2172
      %v2174 = vadd.f32 %v2170, %v2173
      %vm2175 = vweird.f32 %v1950
      %vm2176 = vweird.f32 %v2170
      %vm2177 = vmor %vm2175, %vm2176
      %v2178 = vsel %vm2177, %v2170, %v2174
      %v2179 = vand.u32 2147483647, %v1950
      %vm2180 = vcmp.eq.f32.partialorder %v2179, 8.507059e+37
      %v2181 = vand.u32 %v1950, 2147483648
      %v2182 = vor.u32 1.1754944e-38, %v2181
      %v2183 = vsel %vm2180, %v2182, %v2178
      %v2184 = vmul.f32 %v1661, %v2183
      %v2185 = vrcp.pop %v1962
      %v2186 = vmul.f32 %v1962, %v2185
      %v2187 = vsub.f32 1.0, %v2186
      %v2188 = vmul.f32 %v2185, %v2187
      %v2189 = vadd.f32 %v2185, %v2188
      %vm2190 = vweird.f32 %v1962
      %vm2191 = vweird.f32 %v2185
      %vm2192 = vmor %vm2190, %vm2191
      %v2193 = vsel %vm2192, %v2185, %v2189
      %v2194 = vand.u32 2147483647, %v1962
      %vm2195 = vcmp.eq.f32.partialorder %v2194, 8.507059e+37
      %v2196 = vand.u32 %v1962, 2147483648
      %v2197 = vor.u32 1.1754944e-38, %v2196
      %v2198 = vsel %vm2195, %v2197, %v2193
      %v2199 = vmul.f32 %v1662, %v2198
      %v2200 = vrcp.pop %v1974
      %v2201 = vmul.f32 %v1974, %v2200
      %v2202 = vsub.f32 1.0, %v2201
      %v2203 = vmul.f32 %v2200, %v2202
      %v2204 = vadd.f32 %v2200, %v2203
      %vm2205 = vweird.f32 %v1974
      %vm2206 = vweird.f32 %v2200
      %vm2207 = vmor %vm2205, %vm2206
      %v2208 = vsel %vm2207, %v2200, %v2204
      %v2209 = vand.u32 2147483647, %v1974
      %vm2210 = vcmp.eq.f32.partialorder %v2209, 8.507059e+37
      %v2211 = vand.u32 %v1974, 2147483648
      %v2212 = vor.u32 1.1754944e-38, %v2211
      %v2213 = vsel %vm2210, %v2212, %v2208
      %v2214 = vmul.f32 %v1663, %v2213
      %2216 = vset.pattern.permute.xlu0 0
      %2217 = vperm.xlu0 %2216, %v1767
      %v2218 = vpop.permute.xlu0 %2217
      %2221 = vset.pattern.permute.xlu0 0
      %2222 = vperm.xlu0 %2221, %v1768
      %v2223 = vpop.permute.xlu0 %2222
      %2226 = vset.pattern.permute.xlu0 0
      %2227 = vperm.xlu0 %2226, %v1769
      %v2228 = vpop.permute.xlu0 %2227
      %2231 = vset.pattern.permute.xlu0 0
      %2232 = vperm.xlu0 %2231, %v1770
      %v2233 = vpop.permute.xlu0 %2232
      %2236 = vset.pattern.permute.xlu0 0
      %2237 = vperm.xlu0 %2236, %v1771
      %v2238 = vpop.permute.xlu0 %2237
      %2241 = vset.pattern.permute.xlu0 0
      %2242 = vperm.xlu0 %2241, %v1772
      %v2243 = vpop.permute.xlu0 %2242
      %2246 = vset.pattern.permute.xlu0 0
      %2247 = vperm.xlu0 %2246, %v1773
      %v2248 = vpop.permute.xlu0 %2247
      %2251 = vset.pattern.permute.xlu0 0
      %2252 = vperm.xlu0 %2251, %v1774
      %v2253 = vpop.permute.xlu0 %2252
      %2256 = vset.pattern.permute.xlu0 0
      %2257 = vperm.xlu0 %2256, %v1775
      %v2258 = vpop.permute.xlu0 %2257
      %2261 = vset.pattern.permute.xlu0 0
      %2262 = vperm.xlu0 %2261, %v1776
      %v2263 = vpop.permute.xlu0 %2262
      %2266 = vset.pattern.permute.xlu0 0
      %2267 = vperm.xlu0 %2266, %v1777
      %v2268 = vpop.permute.xlu0 %2267
      %2271 = vset.pattern.permute.xlu0 0
      %2272 = vperm.xlu0 %2271, %v1778
      %v2273 = vpop.permute.xlu0 %2272
      %2276 = vset.pattern.permute.xlu0 0
      %2277 = vperm.xlu0 %2276, %v1779
      %v2278 = vpop.permute.xlu0 %2277
      %2281 = vset.pattern.permute.xlu0 0
      %2282 = vperm.xlu0 %2281, %v1780
      %v2283 = vpop.permute.xlu0 %2282
      %2286 = vset.pattern.permute.xlu0 0
      %2287 = vperm.xlu0 %2286, %v1781
      %v2288 = vpop.permute.xlu0 %2287
      %2291 = vset.pattern.permute.xlu0 0
      %2292 = vperm.xlu0 %2291, %v1782
      %v2293 = vpop.permute.xlu0 %2292
      %2295 = vst [vmem:[#allocation12] sm:$0xff] %v2218
      %2296 = vst [vmem:[#allocation12 + $0x8] sm:$0xff] %v2223
      %2297 = vst [vmem:[#allocation12 + $0x10] sm:$0xff] %v2228
      %2298 = vst [vmem:[#allocation12 + $0x18] sm:$0xff] %v2233
      %2299 = vst [vmem:[#allocation12 + $0x20] sm:$0xff] %v2238
      %2300 = vst [vmem:[#allocation12 + $0x28] sm:$0xff] %v2243
      %2301 = vst [vmem:[#allocation12 + $0x30] sm:$0xff] %v2248
      %2302 = vst [vmem:[#allocation12 + $0x38] sm:$0xff] %v2253
      %2303 = vst [vmem:[#allocation12 + $0x40] sm:$0xff] %v2258
      %2304 = vst [vmem:[#allocation12 + $0x48] sm:$0xff] %v2263
      %2305 = vst [vmem:[#allocation12 + $0x50] sm:$0xff] %v2268
      %2306 = vst [vmem:[#allocation12 + $0x58] sm:$0xff] %v2273
      %2307 = vst [vmem:[#allocation12 + $0x60] sm:$0xff] %v2278
      %2308 = vst [vmem:[#allocation12 + $0x68] sm:$0xff] %v2283
      %2309 = vst [vmem:[#allocation12 + $0x70] sm:$0xff] %v2288
      %2310 = vst [vmem:[#allocation12 + $0x78] sm:$0xff] %v2293
      %2312 = vset.pattern.permute.xlu0 0
      %2313 = vperm.xlu0 %2312, %v1989
      %v2314 = vpop.permute.xlu0 %2313
      %2317 = vset.pattern.permute.xlu0 0
      %2318 = vperm.xlu0 %2317, %v2004
      %v2319 = vpop.permute.xlu0 %2318
      %2322 = vset.pattern.permute.xlu0 0
      %2323 = vperm.xlu0 %2322, %v2019
      %v2324 = vpop.permute.xlu0 %2323
      %2327 = vset.pattern.permute.xlu0 0
      %2328 = vperm.xlu0 %2327, %v2034
      %v2329 = vpop.permute.xlu0 %2328
      %2332 = vset.pattern.permute.xlu0 0
      %2333 = vperm.xlu0 %2332, %v2049
      %v2334 = vpop.permute.xlu0 %2333
      %2337 = vset.pattern.permute.xlu0 0
      %2338 = vperm.xlu0 %2337, %v2064
      %v2339 = vpop.permute.xlu0 %2338
      %2342 = vset.pattern.permute.xlu0 0
      %2343 = vperm.xlu0 %2342, %v2079
      %v2344 = vpop.permute.xlu0 %2343
      %2347 = vset.pattern.permute.xlu0 0
      %2348 = vperm.xlu0 %2347, %v2094
      %v2349 = vpop.permute.xlu0 %2348
      %2352 = vset.pattern.permute.xlu0 0
      %2353 = vperm.xlu0 %2352, %v2109
      %v2354 = vpop.permute.xlu0 %2353
      %2357 = vset.pattern.permute.xlu0 0
      %2358 = vperm.xlu0 %2357, %v2124
      %v2359 = vpop.permute.xlu0 %2358
      %2362 = vset.pattern.permute.xlu0 0
      %2363 = vperm.xlu0 %2362, %v2139
      %v2364 = vpop.permute.xlu0 %2363
      %2367 = vset.pattern.permute.xlu0 0
      %2368 = vperm.xlu0 %2367, %v2154
      %v2369 = vpop.permute.xlu0 %2368
      %2372 = vset.pattern.permute.xlu0 0
      %2373 = vperm.xlu0 %2372, %v2169
      %v2374 = vpop.permute.xlu0 %2373
      %2377 = vset.pattern.permute.xlu0 0
      %2378 = vperm.xlu0 %2377, %v2184
      %v2379 = vpop.permute.xlu0 %2378
      %2382 = vset.pattern.permute.xlu0 0
      %2383 = vperm.xlu0 %2382, %v2199
      %v2384 = vpop.permute.xlu0 %2383
      %2387 = vset.pattern.permute.xlu0 0
      %2388 = vperm.xlu0 %2387, %v2214
      %v2389 = vpop.permute.xlu0 %2388
      %2391 = vst [vmem:[#allocation13] sm:$0xff] %v2314
      %2392 = vst [vmem:[#allocation13 + $0x8] sm:$0xff] %v2319
      %2393 = vst [vmem:[#allocation13 + $0x10] sm:$0xff] %v2324
      %2394 = vst [vmem:[#allocation13 + $0x18] sm:$0xff] %v2329
      %2395 = vst [vmem:[#allocation13 + $0x20] sm:$0xff] %v2334
      %2396 = vst [vmem:[#allocation13 + $0x28] sm:$0xff] %v2339
      %2397 = vst [vmem:[#allocation13 + $0x30] sm:$0xff] %v2344
      %2398 = vst [vmem:[#allocation13 + $0x38] sm:$0xff] %v2349
      %2399 = vst [vmem:[#allocation13 + $0x40] sm:$0xff] %v2354
      %2400 = vst [vmem:[#allocation13 + $0x48] sm:$0xff] %v2359
      %2401 = vst [vmem:[#allocation13 + $0x50] sm:$0xff] %v2364
      %2402 = vst [vmem:[#allocation13 + $0x58] sm:$0xff] %v2369
      %2403 = vst [vmem:[#allocation13 + $0x60] sm:$0xff] %v2374
      %2404 = vst [vmem:[#allocation13 + $0x68] sm:$0xff] %v2379
      %2405 = vst [vmem:[#allocation13 + $0x70] sm:$0xff] %v2384
      %2406 = vst [vmem:[#allocation13 + $0x78] sm:$0xff] %v2389
    $region41: #{tpu_custom_call.1} parent=1 // pred_fallthru
      _
    // Predicated region
    $region42: #{tpu_custom_call.1} parent=1 // pred_check
      _
    $region43: #{tpu_custom_call.1} parent=1 // pred_check_branch
      %2408 = sbr.rel (0) target = $region45
    $region44: #{tpu_custom_call.1} parent=1 // pred_region
      %2410 = vsyncadd [#allocation6], 0
      %s2411 = sshll.u32 [#allocation12], 4
      %s2412 = int_to_ptr.vmem [resolvable:$true] %s2411
      %s2413 = sshll.u32 %s4, 4
      %s2414 = int_to_ptr.hbm [resolvable:$true] %s2413
      %2419 = dma.vmem_to_hbm [thread:$0]  %s2412, 2048, %s2414, [#allocation6], 128, 128, 8
    $region45: #{tpu_custom_call.1} parent=1 // pred_fallthru
      _
    // Predicated region
    $region46: #{tpu_custom_call.1} parent=1 // pred_check
      _
    $region47: #{tpu_custom_call.1} parent=1 // pred_check_branch
      %2421 = sbr.rel (0) target = $region49
    $region48: #{tpu_custom_call.1} parent=1 // pred_region
      %2423 = vsyncadd [#allocation14], 0
      %s2424 = sshll.u32 [#allocation13], 4
      %s2425 = int_to_ptr.vmem [resolvable:$true] %s2424
      %s2426 = sshll.u32 %s5, 4
      %s2427 = int_to_ptr.hbm [resolvable:$true] %s2426
      %2432 = dma.vmem_to_hbm [thread:$0]  %s2425, 2048, %s2427, [#allocation14], 128, 128, 8
    $region49: #{tpu_custom_call.1} parent=1 // pred_fallthru
      _
    // Predicated region
    $region50: #{tpu_custom_call.1} parent=1 // pred_check
      _
    $region51: #{tpu_custom_call.1} parent=1 // pred_check_branch
      %2434 = sbr.rel (0) target = $region53
    $region52: #{tpu_custom_call.1} parent=1 // pred_region
      %2436 = dma.done [#allocation6], 2048
    $region53: #{tpu_custom_call.1} parent=1 // pred_fallthru
      _
    // Predicated region
    $region54: #{tpu_custom_call.1} parent=1 // pred_check
      _
    $region55: #{tpu_custom_call.1} parent=1 // pred_check_branch
      %2438 = sbr.rel (0) target = $region57
    $region56: #{tpu_custom_call.1} parent=1 // pred_region
      %2440 = dma.done [#allocation14], 2048
    $region57: #{tpu_custom_call.1} parent=1 // pred_fallthru
      _
    %2441 = vsyncpa [#allocation5], 1
    %2442 = vsyncpa [#allocation8], 1
    %2443 = vsyncpa [#allocation11], 1
    %2444 = vsyncpa [#allocation6], 1
    %2445 = vsyncpa [#allocation14], 1

</llo_original>
